<compile_context>
chip_gen: v6e
topology: v6e:2x2x1
jax: 0.10.0
libtpu: 0.0.40
codegen_flags: <defaults>
</compile_context>

<pallas_src>
import jax
import jax.numpy as jnp
from jax.experimental import pallas as pl
from jax.experimental.pallas import tpu as pltpu

# Small, self-consistent model dims
B, S, D, H, DFF = 2, 8, 32, 4, 64
DH = D // H
BS = B * S
D3 = 3 * D
EPS = 1e-6                      # LayerNormalizationLayer eps
SCALE = 1.0 / (DH ** 0.5)
MASK_PENALTY = 1e9              # additive bias magnitude for masked keys


def encoder_block_kernel(x_ref, mask_ref, wqkv_ref, wo_ref, w1_ref, w2_ref,
                         vec_ref, out_ref):
    x = x_ref[...]                              # (B*S, D) f32

    # Packed small vectors: one slab, static row (sublane) slices, lane
    # prefixes only (no cross-lane relayout).
    vecs = vec_ref[...]                         # (8, 3D) f32
    b_qkv = vecs[0:1, :]                        # (1, 3D)   bq*scale | bk | bv
    b1    = vecs[1:2, :DFF]                     # (1, DFF)
    bo    = vecs[2:3, :D]                       # (1, D)
    ln1_a = vecs[3:4, :D]
    ln1_b = vecs[4:5, :D]
    b2    = vecs[5:6, :D]
    ln2_a = vecs[6:7, :D]
    ln2_b = vecs[7:8, :D]

    x_bf = x.astype(jnp.bfloat16)

    # ---- fused QKV projection (Q = K = V = x) ----
    # wq / bq are pre-scaled by 1/sqrt(DH) in the wrapper; bf16 operands,
    # f32 accumulation on the MXU; bias add in f32.
    qkv = (jnp.dot(x_bf, wqkv_ref[...], preferred_element_type=jnp.float32)
           + b_qkv)                             # (BS, 3D) f32
    qkv_bf = qkv.astype(jnp.bfloat16)           # single hoisted cast

    # Additive mask bias via arithmetic: mask=1 -> 0, mask=0 -> -1e9.
    mask_bias = (mask_ref[...] - 1.0) * jnp.float32(MASK_PENALTY)   # (B,S,S)

    # Per-head attention; W_o contraction folded into the loop (no concat).
    # wo_ref is (H, DH, D): wo_ref[h] == W_o[h*DH:(h+1)*DH, :].
    attn = bo                                   # (1, D) f32, broadcasts on add
    for h in range(H):                          # static unrolled, H = 4
        qh = qkv_bf[:, h * DH:(h + 1) * DH].reshape(B, S, DH)
        kh = qkv_bf[:, D + h * DH:D + (h + 1) * DH].reshape(B, S, DH)
        vh = qkv_bf[:, 2 * D + h * DH:2 * D + (h + 1) * DH].reshape(B, S, DH)
        sc = jnp.einsum("bqd,bkd->bqk", qh, kh,
                        preferred_element_type=jnp.float32) + mask_bias
        sc = sc - jnp.max(sc, axis=-1, keepdims=True)
        p = jnp.exp(sc)
        p = p * pl.reciprocal(jnp.sum(p, axis=-1, keepdims=True), approx=True)
        oh = jnp.einsum("bqk,bkd->bqd", p.astype(jnp.bfloat16), vh,
                        preferred_element_type=jnp.float32)         # (B,S,DH)
        attn = attn + jnp.dot(oh.reshape(BS, DH).astype(jnp.bfloat16),
                              wo_ref[h], preferred_element_type=jnp.float32)

    def layernorm(val, alpha, bias):
        # Tutorial LayerNormalizationLayer: alpha*(x-mean)/(std+eps)+bias,
        # unbiased std (ddof=1). Intentionally NOT torch.nn.LayerNorm.
        # Kept in f32 (v5e has no bf16 VPU/EUP).
        mean = jnp.mean(val, axis=-1, keepdims=True)
        cent = val - mean
        var = jnp.sum(cent * cent, axis=-1, keepdims=True) * (1.0 / (D - 1))
        inv = pl.reciprocal(jnp.sqrt(var) + EPS, approx=True)
        return cent * (alpha * inv) + bias

    # residual_blocks[0]: x + attn(x); then layer_normalization_layers[0]
    # TODO(synk): dropout inside ResidualBlock is omitted (eval / p=0 behavior).
    x1 = layernorm(x + attn, ln1_a, ln1_b)

    # ---- feed-forward: Linear -> ReLU -> Linear ----
    h1 = jnp.maximum(
        jnp.dot(x1.astype(jnp.bfloat16), w1_ref[...],
                preferred_element_type=jnp.float32) + b1, 0.0)
    ff = jnp.dot(h1.astype(jnp.bfloat16), w2_ref[...],
                 preferred_element_type=jnp.float32) + b2

    # residual_blocks[1] + layer_normalization_layers[1]
    x2 = layernorm(x1 + ff, ln2_a, ln2_b)

    out_ref[...] = x2.astype(out_ref.dtype)


def _pack_params(params):
    """Pack weights/biases in the wrapper (done once, free at kernel time)."""
    bf16 = jnp.bfloat16
    # Fused QKV weight (D, 3D); 1/sqrt(DH) folded into the Q columns (in f32,
    # before the bf16 cast).
    w_qkv = jnp.concatenate(
        [params["wq"] * SCALE, params["wk"], params["wv"]], axis=1).astype(bf16)
    # W_o pre-reshaped to (H, DH, D): heads indexed on the leading dim.
    wo = params["wo"].reshape(H, DH, D).astype(bf16)
    w1 = params["w1"].astype(bf16)
    w2 = params["w2"].astype(bf16)

    def row(v):
        v = v.reshape(1, -1)
        return jnp.pad(v, ((0, 0), (0, D3 - v.shape[1])))

    # One (8, 3D) f32 slab for all ten small vectors -> one DMA instead of ten.
    vecs = jnp.concatenate([
        row(jnp.concatenate([params["bq"] * SCALE, params["bk"], params["bv"]],
                            axis=1)),                      # row 0: b_qkv (96)
        row(params["b1"]),                                 # row 1: b1 (64)
        row(params["bo"]),                                 # row 2: bo
        row(params["ln1_a"]),                              # row 3
        row(params["ln1_b"]),                              # row 4
        row(params["b2"]),                                 # row 5
        row(params["ln2_a"]),                              # row 6
        row(params["ln2_b"]),                              # row 7
    ], axis=0).astype(jnp.float32)
    return w_qkv, wo, w1, w2, vecs


def encoder_block(x, src_mask, params):
    """x: (B, S, D) f32, src_mask: (B, S, S) f32 (1=keep, 0=mask)."""
    w_qkv, wo, w1, w2, vecs = _pack_params(params)
    x2d = x.reshape(BS, D)   # flatten batch*seq outside the kernel (free)

    # Advisory cost estimate for XLA's scheduler around the custom call.
    flops = (2 * BS * D * D3                 # fused QKV projection
             + H * 2 * (2 * B * S * S * DH)  # scores + PV per head
             + H * 2 * BS * DH * D           # per-head output projection
             + 2 * BS * D * DFF * 2)         # two FFN matmuls
    transcendentals = B * H * S * S + B * H * S + 2 * BS
    bytes_accessed = (x2d.size * 4 + src_mask.size * 4 + w_qkv.size * 2
                      + wo.size * 2 + w1.size * 2 + w2.size * 2
                      + vecs.size * 4 + BS * D * 4)

    vmem = pl.BlockSpec(memory_space=pltpu.MemorySpace.VMEM)
    out2d = pl.pallas_call(
        encoder_block_kernel,
        out_shape=jax.ShapeDtypeStruct((BS, D), x.dtype),
        in_specs=[vmem] * 7,
        out_specs=vmem,
        cost_estimate=pl.CostEstimate(flops=flops,
                                      transcendentals=transcendentals,
                                      bytes_accessed=bytes_accessed),
    )(x2d, src_mask, w_qkv, wo, w1, w2, vecs)
    return out2d.reshape(B, S, D)


def init_params(key):
    ks = jax.random.split(key, 8)
    scale = 0.02
    return {
        "wq": jax.random.normal(ks[0], (D, D), jnp.float32) * scale,
        "wk": jax.random.normal(ks[1], (D, D), jnp.float32) * scale,
        "wv": jax.random.normal(ks[2], (D, D), jnp.float32) * scale,
        "wo": jax.random.normal(ks[3], (D, D), jnp.float32) * scale,
        "bq": jnp.zeros((1, D), jnp.float32),
        "bk": jnp.zeros((1, D), jnp.float32),
        "bv": jnp.zeros((1, D), jnp.float32),
        "bo": jnp.zeros((1, D), jnp.float32),
        "w1": jax.random.normal(ks[4], (D, DFF), jnp.float32) * scale,
        "b1": jnp.zeros((1, DFF), jnp.float32),
        "w2": jax.random.normal(ks[5], (DFF, D), jnp.float32) * scale,
        "b2": jnp.zeros((1, D), jnp.float32),
        "ln1_a": jnp.ones((1, D), jnp.float32),
        "ln1_b": jnp.zeros((1, D), jnp.float32),
        "ln2_a": jnp.ones((1, D), jnp.float32),
        "ln2_b": jnp.zeros((1, D), jnp.float32),
    }


if __name__ == "__main__":
    key = jax.random.PRNGKey(0)
    k_x, k_p = jax.random.split(key)
    x = jax.random.normal(k_x, (B, S, D), jnp.float32)

    # src_mask: batch 0 attends everywhere; batch 1 masks out the last 2 keys.
    mask = jnp.ones((B, S, S), jnp.float32)
    mask = mask.at[1, :, S - 2:].set(0.0)

    params = init_params(k_p)

    out = encoder_block(x, mask, params)
    out = jax.block_until_ready(out)
    assert out.shape == (B, S, D)
    assert bool(jnp.all(jnp.isfinite(out)))
    print("KERNEL_OK")
</pallas_src>

<mosaic_0001>
module attributes {stable_mosaic.version = 11 : i64} {
  func.func @encoder_block_kernel(%arg0: memref<16x32xf32, #tpu.memory_space<vmem>>, %arg1: memref<2x8x8xf32, #tpu.memory_space<vmem>>, %arg2: memref<32x96xbf16, #tpu.memory_space<vmem>>, %arg3: memref<4x8x32xbf16, #tpu.memory_space<vmem>>, %arg4: memref<32x64xbf16, #tpu.memory_space<vmem>>, %arg5: memref<64x32xbf16, #tpu.memory_space<vmem>>, %arg6: memref<8x96xf32, #tpu.memory_space<vmem>>, %arg7: memref<16x32xf32, #tpu.memory_space<vmem>>) attributes {dimension_semantics = [], scalar_prefetch = 0 : i64, scratch_operands = 0 : i64, tpu.core_type = #tpu.core_type<tc>} {
    %c0 = arith.constant 0 : index
    %c0_0 = arith.constant 0 : index
    %0 = vector.load %arg0[%c0, %c0_0] : memref<16x32xf32, #tpu.memory_space<vmem>>, vector<16x32xf32>
    %c0_1 = arith.constant 0 : index
    %c0_2 = arith.constant 0 : index
    %1 = vector.load %arg6[%c0_1, %c0_2] : memref<8x96xf32, #tpu.memory_space<vmem>>, vector<8x96xf32>
    %2 = vector.extract_strided_slice %1 {offsets = [0, 0], sizes = [1, 96], strides = [1, 1]} : vector<8x96xf32> to vector<1x96xf32>
    %3 = vector.extract_strided_slice %1 {offsets = [1, 0], sizes = [1, 64], strides = [1, 1]} : vector<8x96xf32> to vector<1x64xf32>
    %4 = vector.extract_strided_slice %1 {offsets = [2, 0], sizes = [1, 32], strides = [1, 1]} : vector<8x96xf32> to vector<1x32xf32>
    %5 = vector.extract_strided_slice %1 {offsets = [3, 0], sizes = [1, 32], strides = [1, 1]} : vector<8x96xf32> to vector<1x32xf32>
    %6 = vector.extract_strided_slice %1 {offsets = [4, 0], sizes = [1, 32], strides = [1, 1]} : vector<8x96xf32> to vector<1x32xf32>
    %7 = vector.extract_strided_slice %1 {offsets = [5, 0], sizes = [1, 32], strides = [1, 1]} : vector<8x96xf32> to vector<1x32xf32>
    %8 = vector.extract_strided_slice %1 {offsets = [6, 0], sizes = [1, 32], strides = [1, 1]} : vector<8x96xf32> to vector<1x32xf32>
    %9 = vector.extract_strided_slice %1 {offsets = [7, 0], sizes = [1, 32], strides = [1, 1]} : vector<8x96xf32> to vector<1x32xf32>
    %10 = arith.truncf %0 : vector<16x32xf32> to vector<16x32xbf16>
    %c0_3 = arith.constant 0 : index
    %c0_4 = arith.constant 0 : index
    %11 = vector.load %arg2[%c0_3, %c0_4] : memref<32x96xbf16, #tpu.memory_space<vmem>>, vector<32x96xbf16>
    %cst = arith.constant dense<0.000000e+00> : vector<16x96xf32>
    %12 = tpu.matmul %10, %11, %cst {dimension_numbers = #tpu.dot_dimension_numbers<[1], [0], [0], [1], [0, 0, 1, 1], [], []>} : vector<16x32xbf16>, vector<32x96xbf16>, vector<16x96xf32> -> vector<16x96xf32>
    %13 = vector.broadcast %2 : vector<1x96xf32> to vector<16x96xf32>
    %14 = arith.addf %12, %13 : vector<16x96xf32>
    %15 = arith.truncf %14 : vector<16x96xf32> to vector<16x96xbf16>
    %c0_5 = arith.constant 0 : index
    %c0_6 = arith.constant 0 : index
    %c0_7 = arith.constant 0 : index
    %16 = vector.load %arg1[%c0_5, %c0_6, %c0_7] : memref<2x8x8xf32, #tpu.memory_space<vmem>>, vector<2x8x8xf32>
    %cst_8 = arith.constant 1.000000e+00 : f32
    %17 = vector.broadcast %cst_8 : f32 to vector<2x8x8xf32>
    %18 = arith.subf %16, %17 : vector<2x8x8xf32>
    %cst_9 = arith.constant 1.000000e+09 : f32
    %19 = vector.broadcast %cst_9 : f32 to vector<2x8x8xf32>
    %20 = arith.mulf %18, %19 : vector<2x8x8xf32>
    %21 = vector.extract_strided_slice %15 {offsets = [0, 0], sizes = [16, 8], strides = [1, 1]} : vector<16x96xbf16> to vector<16x8xbf16>
    %22 = vector.shape_cast %21 : vector<16x8xbf16> to vector<2x8x8xbf16>
    %23 = vector.extract_strided_slice %15 {offsets = [0, 32], sizes = [16, 8], strides = [1, 1]} : vector<16x96xbf16> to vector<16x8xbf16>
    %24 = vector.shape_cast %23 : vector<16x8xbf16> to vector<2x8x8xbf16>
    %25 = vector.extract_strided_slice %15 {offsets = [0, 64], sizes = [16, 8], strides = [1, 1]} : vector<16x96xbf16> to vector<16x8xbf16>
    %26 = vector.shape_cast %25 : vector<16x8xbf16> to vector<2x8x8xbf16>
    "tpu.trace_start"() <{level = 10 : i32, message = "bqd,bkd->bqk"}> : () -> ()
    %cst_10 = arith.constant dense<0.000000e+00> : vector<2x8x8xf32>
    %27 = tpu.matmul %22, %24, %cst_10 {dimension_numbers = #tpu.dot_dimension_numbers<[2], [2], [1], [1], [0, 0, 0, 1, 1, 1], [0], [0]>} : vector<2x8x8xbf16>, vector<2x8x8xbf16>, vector<2x8x8xf32> -> vector<2x8x8xf32>
    "tpu.trace_stop"() : () -> ()
    %28 = arith.addf %27, %20 : vector<2x8x8xf32>
    %cst_11 = arith.constant dense<0xFF800000> : vector<2x8xf32>
    %29 = vector.multi_reduction <maximumf>, %28, %cst_11 [2] : vector<2x8x8xf32> to vector<2x8xf32>
    %30 = vector.shape_cast %29 : vector<2x8xf32> to vector<2x8x1xf32>
    %31 = vector.broadcast %30 : vector<2x8x1xf32> to vector<2x8x8xf32>
    %32 = arith.subf %28, %31 : vector<2x8x8xf32>
    %33 = math.exp %32 : vector<2x8x8xf32>
    %cst_12 = arith.constant dense<0.000000e+00> : vector<2x8xf32>
    %34 = vector.multi_reduction <add>, %33, %cst_12 [2] : vector<2x8x8xf32> to vector<2x8xf32>
    %35 = vector.shape_cast %34 : vector<2x8xf32> to vector<2x8x1xf32>
    %36 = tpu.reciprocal %35 {approx = true} : vector<2x8x1xf32> -> vector<2x8x1xf32>
    %37 = vector.broadcast %36 : vector<2x8x1xf32> to vector<2x8x8xf32>
    %38 = arith.mulf %33, %37 : vector<2x8x8xf32>
    %39 = arith.truncf %38 : vector<2x8x8xf32> to vector<2x8x8xbf16>
    "tpu.trace_start"() <{level = 10 : i32, message = "bqk,bkd->bqd"}> : () -> ()
    %cst_13 = arith.constant dense<0.000000e+00> : vector<2x8x8xf32>
    %40 = tpu.matmul %39, %26, %cst_13 {dimension_numbers = #tpu.dot_dimension_numbers<[2], [1], [1], [2], [0, 0, 0, 1, 1, 2], [0], [0]>} : vector<2x8x8xbf16>, vector<2x8x8xbf16>, vector<2x8x8xf32> -> vector<2x8x8xf32>
    "tpu.trace_stop"() : () -> ()
    %41 = vector.shape_cast %40 : vector<2x8x8xf32> to vector<16x8xf32>
    %42 = arith.truncf %41 : vector<16x8xf32> to vector<16x8xbf16>
    %c0_14 = arith.constant 0 : index
    %c0_15 = arith.constant 0 : index
    %c0_16 = arith.constant 0 : index
    %43 = vector.load %arg3[%c0_14, %c0_15, %c0_16] : memref<4x8x32xbf16, #tpu.memory_space<vmem>>, vector<1x8x32xbf16>
    %44 = vector.shape_cast %43 : vector<1x8x32xbf16> to vector<8x32xbf16>
    %cst_17 = arith.constant dense<0.000000e+00> : vector<16x32xf32>
    %45 = tpu.matmul %42, %44, %cst_17 {dimension_numbers = #tpu.dot_dimension_numbers<[1], [0], [0], [1], [0, 0, 1, 1], [], []>} : vector<16x8xbf16>, vector<8x32xbf16>, vector<16x32xf32> -> vector<16x32xf32>
    %46 = vector.broadcast %4 : vector<1x32xf32> to vector<16x32xf32>
    %47 = arith.addf %46, %45 : vector<16x32xf32>
    %48 = vector.extract_strided_slice %15 {offsets = [0, 8], sizes = [16, 8], strides = [1, 1]} : vector<16x96xbf16> to vector<16x8xbf16>
    %49 = vector.shape_cast %48 : vector<16x8xbf16> to vector<2x8x8xbf16>
    %50 = vector.extract_strided_slice %15 {offsets = [0, 40], sizes = [16, 8], strides = [1, 1]} : vector<16x96xbf16> to vector<16x8xbf16>
    %51 = vector.shape_cast %50 : vector<16x8xbf16> to vector<2x8x8xbf16>
    %52 = vector.extract_strided_slice %15 {offsets = [0, 72], sizes = [16, 8], strides = [1, 1]} : vector<16x96xbf16> to vector<16x8xbf16>
    %53 = vector.shape_cast %52 : vector<16x8xbf16> to vector<2x8x8xbf16>
    "tpu.trace_start"() <{level = 10 : i32, message = "bqd,bkd->bqk"}> : () -> ()
    %cst_18 = arith.constant dense<0.000000e+00> : vector<2x8x8xf32>
    %54 = tpu.matmul %49, %51, %cst_18 {dimension_numbers = #tpu.dot_dimension_numbers<[2], [2], [1], [1], [0, 0, 0, 1, 1, 1], [0], [0]>} : vector<2x8x8xbf16>, vector<2x8x8xbf16>, vector<2x8x8xf32> -> vector<2x8x8xf32>
    "tpu.trace_stop"() : () -> ()
    %55 = arith.addf %54, %20 : vector<2x8x8xf32>
    %cst_19 = arith.constant dense<0xFF800000> : vector<2x8xf32>
    %56 = vector.multi_reduction <maximumf>, %55, %cst_19 [2] : vector<2x8x8xf32> to vector<2x8xf32>
    %57 = vector.shape_cast %56 : vector<2x8xf32> to vector<2x8x1xf32>
    %58 = vector.broadcast %57 : vector<2x8x1xf32> to vector<2x8x8xf32>
    %59 = arith.subf %55, %58 : vector<2x8x8xf32>
    %60 = math.exp %59 : vector<2x8x8xf32>
    %cst_20 = arith.constant dense<0.000000e+00> : vector<2x8xf32>
    %61 = vector.multi_reduction <add>, %60, %cst_20 [2] : vector<2x8x8xf32> to vector<2x8xf32>
    %62 = vector.shape_cast %61 : vector<2x8xf32> to vector<2x8x1xf32>
    %63 = tpu.reciprocal %62 {approx = true} : vector<2x8x1xf32> -> vector<2x8x1xf32>
    %64 = vector.broadcast %63 : vector<2x8x1xf32> to vector<2x8x8xf32>
    %65 = arith.mulf %60, %64 : vector<2x8x8xf32>
    %66 = arith.truncf %65 : vector<2x8x8xf32> to vector<2x8x8xbf16>
    "tpu.trace_start"() <{level = 10 : i32, message = "bqk,bkd->bqd"}> : () -> ()
    %cst_21 = arith.constant dense<0.000000e+00> : vector<2x8x8xf32>
    %67 = tpu.matmul %66, %53, %cst_21 {dimension_numbers = #tpu.dot_dimension_numbers<[2], [1], [1], [2], [0, 0, 0, 1, 1, 2], [0], [0]>} : vector<2x8x8xbf16>, vector<2x8x8xbf16>, vector<2x8x8xf32> -> vector<2x8x8xf32>
    "tpu.trace_stop"() : () -> ()
    %68 = vector.shape_cast %67 : vector<2x8x8xf32> to vector<16x8xf32>
    %69 = arith.truncf %68 : vector<16x8xf32> to vector<16x8xbf16>
    %c1 = arith.constant 1 : index
    %c0_22 = arith.constant 0 : index
    %c0_23 = arith.constant 0 : index
    %70 = vector.load %arg3[%c1, %c0_22, %c0_23] : memref<4x8x32xbf16, #tpu.memory_space<vmem>>, vector<1x8x32xbf16>
    %71 = vector.shape_cast %70 : vector<1x8x32xbf16> to vector<8x32xbf16>
    %cst_24 = arith.constant dense<0.000000e+00> : vector<16x32xf32>
    %72 = tpu.matmul %69, %71, %cst_24 {dimension_numbers = #tpu.dot_dimension_numbers<[1], [0], [0], [1], [0, 0, 1, 1], [], []>} : vector<16x8xbf16>, vector<8x32xbf16>, vector<16x32xf32> -> vector<16x32xf32>
    %73 = arith.addf %47, %72 : vector<16x32xf32>
    %74 = vector.extract_strided_slice %15 {offsets = [0, 16], sizes = [16, 8], strides = [1, 1]} : vector<16x96xbf16> to vector<16x8xbf16>
    %75 = vector.shape_cast %74 : vector<16x8xbf16> to vector<2x8x8xbf16>
    %76 = vector.extract_strided_slice %15 {offsets = [0, 48], sizes = [16, 8], strides = [1, 1]} : vector<16x96xbf16> to vector<16x8xbf16>
    %77 = vector.shape_cast %76 : vector<16x8xbf16> to vector<2x8x8xbf16>
    %78 = vector.extract_strided_slice %15 {offsets = [0, 80], sizes = [16, 8], strides = [1, 1]} : vector<16x96xbf16> to vector<16x8xbf16>
    %79 = vector.shape_cast %78 : vector<16x8xbf16> to vector<2x8x8xbf16>
    "tpu.trace_start"() <{level = 10 : i32, message = "bqd,bkd->bqk"}> : () -> ()
    %cst_25 = arith.constant dense<0.000000e+00> : vector<2x8x8xf32>
    %80 = tpu.matmul %75, %77, %cst_25 {dimension_numbers = #tpu.dot_dimension_numbers<[2], [2], [1], [1], [0, 0, 0, 1, 1, 1], [0], [0]>} : vector<2x8x8xbf16>, vector<2x8x8xbf16>, vector<2x8x8xf32> -> vector<2x8x8xf32>
    "tpu.trace_stop"() : () -> ()
    %81 = arith.addf %80, %20 : vector<2x8x8xf32>
    %cst_26 = arith.constant dense<0xFF800000> : vector<2x8xf32>
    %82 = vector.multi_reduction <maximumf>, %81, %cst_26 [2] : vector<2x8x8xf32> to vector<2x8xf32>
    %83 = vector.shape_cast %82 : vector<2x8xf32> to vector<2x8x1xf32>
    %84 = vector.broadcast %83 : vector<2x8x1xf32> to vector<2x8x8xf32>
    %85 = arith.subf %81, %84 : vector<2x8x8xf32>
    %86 = math.exp %85 : vector<2x8x8xf32>
    %cst_27 = arith.constant dense<0.000000e+00> : vector<2x8xf32>
    %87 = vector.multi_reduction <add>, %86, %cst_27 [2] : vector<2x8x8xf32> to vector<2x8xf32>
    %88 = vector.shape_cast %87 : vector<2x8xf32> to vector<2x8x1xf32>
    %89 = tpu.reciprocal %88 {approx = true} : vector<2x8x1xf32> -> vector<2x8x1xf32>
    %90 = vector.broadcast %89 : vector<2x8x1xf32> to vector<2x8x8xf32>
    %91 = arith.mulf %86, %90 : vector<2x8x8xf32>
    %92 = arith.truncf %91 : vector<2x8x8xf32> to vector<2x8x8xbf16>
    "tpu.trace_start"() <{level = 10 : i32, message = "bqk,bkd->bqd"}> : () -> ()
    %cst_28 = arith.constant dense<0.000000e+00> : vector<2x8x8xf32>
    %93 = tpu.matmul %92, %79, %cst_28 {dimension_numbers = #tpu.dot_dimension_numbers<[2], [1], [1], [2], [0, 0, 0, 1, 1, 2], [0], [0]>} : vector<2x8x8xbf16>, vector<2x8x8xbf16>, vector<2x8x8xf32> -> vector<2x8x8xf32>
    "tpu.trace_stop"() : () -> ()
    %94 = vector.shape_cast %93 : vector<2x8x8xf32> to vector<16x8xf32>
    %95 = arith.truncf %94 : vector<16x8xf32> to vector<16x8xbf16>
    %c2 = arith.constant 2 : index
    %c0_29 = arith.constant 0 : index
    %c0_30 = arith.constant 0 : index
    %96 = vector.load %arg3[%c2, %c0_29, %c0_30] : memref<4x8x32xbf16, #tpu.memory_space<vmem>>, vector<1x8x32xbf16>
    %97 = vector.shape_cast %96 : vector<1x8x32xbf16> to vector<8x32xbf16>
    %cst_31 = arith.constant dense<0.000000e+00> : vector<16x32xf32>
    %98 = tpu.matmul %95, %97, %cst_31 {dimension_numbers = #tpu.dot_dimension_numbers<[1], [0], [0], [1], [0, 0, 1, 1], [], []>} : vector<16x8xbf16>, vector<8x32xbf16>, vector<16x32xf32> -> vector<16x32xf32>
    %99 = arith.addf %73, %98 : vector<16x32xf32>
    %100 = vector.extract_strided_slice %15 {offsets = [0, 24], sizes = [16, 8], strides = [1, 1]} : vector<16x96xbf16> to vector<16x8xbf16>
    %101 = vector.shape_cast %100 : vector<16x8xbf16> to vector<2x8x8xbf16>
    %102 = vector.extract_strided_slice %15 {offsets = [0, 56], sizes = [16, 8], strides = [1, 1]} : vector<16x96xbf16> to vector<16x8xbf16>
    %103 = vector.shape_cast %102 : vector<16x8xbf16> to vector<2x8x8xbf16>
    %104 = vector.extract_strided_slice %15 {offsets = [0, 88], sizes = [16, 8], strides = [1, 1]} : vector<16x96xbf16> to vector<16x8xbf16>
    %105 = vector.shape_cast %104 : vector<16x8xbf16> to vector<2x8x8xbf16>
    "tpu.trace_start"() <{level = 10 : i32, message = "bqd,bkd->bqk"}> : () -> ()
    %cst_32 = arith.constant dense<0.000000e+00> : vector<2x8x8xf32>
    %106 = tpu.matmul %101, %103, %cst_32 {dimension_numbers = #tpu.dot_dimension_numbers<[2], [2], [1], [1], [0, 0, 0, 1, 1, 1], [0], [0]>} : vector<2x8x8xbf16>, vector<2x8x8xbf16>, vector<2x8x8xf32> -> vector<2x8x8xf32>
    "tpu.trace_stop"() : () -> ()
    %107 = arith.addf %106, %20 : vector<2x8x8xf32>
    %cst_33 = arith.constant dense<0xFF800000> : vector<2x8xf32>
    %108 = vector.multi_reduction <maximumf>, %107, %cst_33 [2] : vector<2x8x8xf32> to vector<2x8xf32>
    %109 = vector.shape_cast %108 : vector<2x8xf32> to vector<2x8x1xf32>
    %110 = vector.broadcast %109 : vector<2x8x1xf32> to vector<2x8x8xf32>
    %111 = arith.subf %107, %110 : vector<2x8x8xf32>
    %112 = math.exp %111 : vector<2x8x8xf32>
    %cst_34 = arith.constant dense<0.000000e+00> : vector<2x8xf32>
    %113 = vector.multi_reduction <add>, %112, %cst_34 [2] : vector<2x8x8xf32> to vector<2x8xf32>
    %114 = vector.shape_cast %113 : vector<2x8xf32> to vector<2x8x1xf32>
    %115 = tpu.reciprocal %114 {approx = true} : vector<2x8x1xf32> -> vector<2x8x1xf32>
    %116 = vector.broadcast %115 : vector<2x8x1xf32> to vector<2x8x8xf32>
    %117 = arith.mulf %112, %116 : vector<2x8x8xf32>
    %118 = arith.truncf %117 : vector<2x8x8xf32> to vector<2x8x8xbf16>
    "tpu.trace_start"() <{level = 10 : i32, message = "bqk,bkd->bqd"}> : () -> ()
    %cst_35 = arith.constant dense<0.000000e+00> : vector<2x8x8xf32>
    %119 = tpu.matmul %118, %105, %cst_35 {dimension_numbers = #tpu.dot_dimension_numbers<[2], [1], [1], [2], [0, 0, 0, 1, 1, 2], [0], [0]>} : vector<2x8x8xbf16>, vector<2x8x8xbf16>, vector<2x8x8xf32> -> vector<2x8x8xf32>
    "tpu.trace_stop"() : () -> ()
    %120 = vector.shape_cast %119 : vector<2x8x8xf32> to vector<16x8xf32>
    %121 = arith.truncf %120 : vector<16x8xf32> to vector<16x8xbf16>
    %c3 = arith.constant 3 : index
    %c0_36 = arith.constant 0 : index
    %c0_37 = arith.constant 0 : index
    %122 = vector.load %arg3[%c3, %c0_36, %c0_37] : memref<4x8x32xbf16, #tpu.memory_space<vmem>>, vector<1x8x32xbf16>
    %123 = vector.shape_cast %122 : vector<1x8x32xbf16> to vector<8x32xbf16>
    %cst_38 = arith.constant dense<0.000000e+00> : vector<16x32xf32>
    %124 = tpu.matmul %121, %123, %cst_38 {dimension_numbers = #tpu.dot_dimension_numbers<[1], [0], [0], [1], [0, 0, 1, 1], [], []>} : vector<16x8xbf16>, vector<8x32xbf16>, vector<16x32xf32> -> vector<16x32xf32>
    %125 = arith.addf %99, %124 : vector<16x32xf32>
    %126 = arith.addf %0, %125 : vector<16x32xf32>
    %cst_39 = arith.constant dense<0.000000e+00> : vector<16xf32>
    %127 = vector.multi_reduction <add>, %126, %cst_39 [1] : vector<16x32xf32> to vector<16xf32>
    %128 = vector.shape_cast %127 : vector<16xf32> to vector<16x1xf32>
    %cst_40 = arith.constant 3.200000e+01 : f32
    %129 = vector.broadcast %cst_40 : f32 to vector<16x1xf32>
    %130 = arith.divf %128, %129 : vector<16x1xf32>
    %131 = vector.broadcast %130 : vector<16x1xf32> to vector<16x32xf32>
    %132 = arith.subf %126, %131 : vector<16x32xf32>
    %133 = arith.mulf %132, %132 : vector<16x32xf32>
    %cst_41 = arith.constant dense<0.000000e+00> : vector<16xf32>
    %134 = vector.multi_reduction <add>, %133, %cst_41 [1] : vector<16x32xf32> to vector<16xf32>
    %135 = vector.shape_cast %134 : vector<16xf32> to vector<16x1xf32>
    %cst_42 = arith.constant 0.0322580636 : f32
    %136 = vector.broadcast %cst_42 : f32 to vector<16x1xf32>
    %137 = arith.mulf %135, %136 : vector<16x1xf32>
    %138 = math.sqrt %137 : vector<16x1xf32>
    %cst_43 = arith.constant 9.99999997E-7 : f32
    %139 = vector.broadcast %cst_43 : f32 to vector<16x1xf32>
    %140 = arith.addf %138, %139 : vector<16x1xf32>
    %141 = tpu.reciprocal %140 {approx = true} : vector<16x1xf32> -> vector<16x1xf32>
    %142 = vector.broadcast %5 : vector<1x32xf32> to vector<16x32xf32>
    %143 = vector.broadcast %141 : vector<16x1xf32> to vector<16x32xf32>
    %144 = arith.mulf %142, %143 : vector<16x32xf32>
    %145 = arith.mulf %132, %144 : vector<16x32xf32>
    %146 = vector.broadcast %6 : vector<1x32xf32> to vector<16x32xf32>
    %147 = arith.addf %145, %146 : vector<16x32xf32>
    %148 = arith.truncf %147 : vector<16x32xf32> to vector<16x32xbf16>
    %c0_44 = arith.constant 0 : index
    %c0_45 = arith.constant 0 : index
    %149 = vector.load %arg4[%c0_44, %c0_45] : memref<32x64xbf16, #tpu.memory_space<vmem>>, vector<32x64xbf16>
    %cst_46 = arith.constant dense<0.000000e+00> : vector<16x64xf32>
    %150 = tpu.matmul %148, %149, %cst_46 {dimension_numbers = #tpu.dot_dimension_numbers<[1], [0], [0], [1], [0, 0, 1, 1], [], []>} : vector<16x32xbf16>, vector<32x64xbf16>, vector<16x64xf32> -> vector<16x64xf32>
    %151 = vector.broadcast %3 : vector<1x64xf32> to vector<16x64xf32>
    %152 = arith.addf %150, %151 : vector<16x64xf32>
    %cst_47 = arith.constant 0.000000e+00 : f32
    %153 = vector.broadcast %cst_47 : f32 to vector<16x64xf32>
    %154 = arith.maximumf %152, %153 : vector<16x64xf32>
    %155 = arith.truncf %154 : vector<16x64xf32> to vector<16x64xbf16>
    %c0_48 = arith.constant 0 : index
    %c0_49 = arith.constant 0 : index
    %156 = vector.load %arg5[%c0_48, %c0_49] : memref<64x32xbf16, #tpu.memory_space<vmem>>, vector<64x32xbf16>
    %cst_50 = arith.constant dense<0.000000e+00> : vector<16x32xf32>
    %157 = tpu.matmul %155, %156, %cst_50 {dimension_numbers = #tpu.dot_dimension_numbers<[1], [0], [0], [1], [0, 0, 1, 1], [], []>} : vector<16x64xbf16>, vector<64x32xbf16>, vector<16x32xf32> -> vector<16x32xf32>
    %158 = vector.broadcast %7 : vector<1x32xf32> to vector<16x32xf32>
    %159 = arith.addf %157, %158 : vector<16x32xf32>
    %160 = arith.addf %147, %159 : vector<16x32xf32>
    %cst_51 = arith.constant dense<0.000000e+00> : vector<16xf32>
    %161 = vector.multi_reduction <add>, %160, %cst_51 [1] : vector<16x32xf32> to vector<16xf32>
    %162 = vector.shape_cast %161 : vector<16xf32> to vector<16x1xf32>
    %cst_52 = arith.constant 3.200000e+01 : f32
    %163 = vector.broadcast %cst_52 : f32 to vector<16x1xf32>
    %164 = arith.divf %162, %163 : vector<16x1xf32>
    %165 = vector.broadcast %164 : vector<16x1xf32> to vector<16x32xf32>
    %166 = arith.subf %160, %165 : vector<16x32xf32>
    %167 = arith.mulf %166, %166 : vector<16x32xf32>
    %cst_53 = arith.constant dense<0.000000e+00> : vector<16xf32>
    %168 = vector.multi_reduction <add>, %167, %cst_53 [1] : vector<16x32xf32> to vector<16xf32>
    %169 = vector.shape_cast %168 : vector<16xf32> to vector<16x1xf32>
    %cst_54 = arith.constant 0.0322580636 : f32
    %170 = vector.broadcast %cst_54 : f32 to vector<16x1xf32>
    %171 = arith.mulf %169, %170 : vector<16x1xf32>
    %172 = math.sqrt %171 : vector<16x1xf32>
    %cst_55 = arith.constant 9.99999997E-7 : f32
    %173 = vector.broadcast %cst_55 : f32 to vector<16x1xf32>
    %174 = arith.addf %172, %173 : vector<16x1xf32>
    %175 = tpu.reciprocal %174 {approx = true} : vector<16x1xf32> -> vector<16x1xf32>
    %176 = vector.broadcast %8 : vector<1x32xf32> to vector<16x32xf32>
    %177 = vector.broadcast %175 : vector<16x1xf32> to vector<16x32xf32>
    %178 = arith.mulf %176, %177 : vector<16x32xf32>
    %179 = arith.mulf %166, %178 : vector<16x32xf32>
    %180 = vector.broadcast %9 : vector<1x32xf32> to vector<16x32xf32>
    %181 = arith.addf %179, %180 : vector<16x32xf32>
    %c0_56 = arith.constant 0 : index
    %c0_57 = arith.constant 0 : index
    %182 = vector.load %arg7[%c0_56, %c0_57] : memref<16x32xf32, #tpu.memory_space<vmem>>, vector<16x32xf32>
    tpu.vector_store %arg7[%c0_56, %c0_57], %181 {strides = array<i32>} : memref<16x32xf32, #tpu.memory_space<vmem>>, vector<16x32xf32>,
    return
  }
}

</mosaic_0001>

<llo_original>
// kernel: tpu_custom_call.1
$region0: #{tpu_custom_call.1}
  #allocation0 [shape = 'u32[]', space=smem, size = 0x4, offset = 0x4, fixed_abs, tag = 'smem constant byte address 0x4 - core index']
  #allocation1 [shape = 'u32[144,128]{1,0:T(1,128)}', space=vmem, size = 0x12000, scoped, tag = 'internal scratch']
  %s0 = inlined_call_operand.vmem [shape: f32[16,32], index: 0, kind: input, shape index: {}]
  %s1 = inlined_call_operand.vmem [shape: f32[2,8,8], index: 1, kind: input, shape index: {}]
  %s2 = inlined_call_operand.vmem [shape: bf16[32,96], index: 2, kind: input, shape index: {}]
  %s3 = inlined_call_operand.hbm [shape: bf16[4,8,32], index: 3, kind: input, shape index: {}]
  %s4 = inlined_call_operand.hbm [shape: bf16[32,64], index: 4, kind: input, shape index: {}]
  %s5 = inlined_call_operand.vmem [shape: bf16[64,32], index: 5, kind: input, shape index: {}]
  %s6 = inlined_call_operand.vmem [shape: f32[8,96], index: 6, kind: input, shape index: {}]
  %s7 = inlined_call_operand.hbm [shape: f32[16,32], index: 7, kind: output, shape index: {}]
  %s8 = sld [smem:[#allocation0]]
  $region46: #{tpu_custom_call.1} parent=0
    _
  %s10 = ssub.s32 1, %s8
  %s11 = scalar_select 0, %s10, %s8
  $region1: #{tpu_custom_call.1} parent=0
    #allocation2 [shape = 'u8[8192]{0}', space=vmem, size = 0x2000, scoped, tag = 'input window, operand 3, single buffered']
    #allocation3 [shape = 's32[1]{0}', space=sflag, size = 0x4, scoped, tag = 'scoped memory for tpu_custom_call.1']
    #allocation4 [shape = 's32[1]{0}', space=sflag, size = 0x4, scoped, tag = 'scoped memory for tpu_custom_call.1']
    #allocation5 [shape = 'u8[8192]{0}', space=vmem, size = 0x2000, scoped, tag = 'input window, operand 4, single buffered']
    #allocation6 [shape = 's32[1]{0}', space=sflag, size = 0x4, scoped, tag = 'scoped memory for tpu_custom_call.1']
    #allocation7 [shape = 'u8[8192]{0}', space=vmem, size = 0x2000, scoped, tag = 'output window, operand 0, single buffered']
    %12 = vsyncpa [#allocation3], 0
    %13 = vsyncpa [#allocation6], 0
    %14 = vsyncpa [#allocation4], 0
    // Predicated region
    $region2: #{tpu_custom_call.1} parent=1 // pred_check
      _
    $region3: #{tpu_custom_call.1} parent=1 // pred_check_branch
      %16 = sbr.rel (0) target = $region5
    $region4: #{tpu_custom_call.1} parent=1 // pred_region
      _
    $region5: #{tpu_custom_call.1} parent=1 // pred_fallthru
      _
    // Predicated region
    $region6: #{tpu_custom_call.1} parent=1 // pred_check
      _
    $region7: #{tpu_custom_call.1} parent=1 // pred_check_branch
      %18 = sbr.rel (0) target = $region9
    $region8: #{tpu_custom_call.1} parent=1 // pred_region
      _
    $region9: #{tpu_custom_call.1} parent=1 // pred_fallthru
      _
    // Predicated region
    $region10: #{tpu_custom_call.1} parent=1 // pred_check
      _
    $region11: #{tpu_custom_call.1} parent=1 // pred_check_branch
      %20 = sbr.rel (0) target = $region13
    $region12: #{tpu_custom_call.1} parent=1 // pred_region
      _
    $region13: #{tpu_custom_call.1} parent=1 // pred_fallthru
      _
    // Predicated region
    $region14: #{tpu_custom_call.1} parent=1 // pred_check
      _
    $region15: #{tpu_custom_call.1} parent=1 // pred_check_branch
      %22 = sbr.rel (0) target = $region17
    $region16: #{tpu_custom_call.1} parent=1 // pred_region
      %s24 = ssub.s32 256, 256
      %25 = vsyncadd [#allocation3], %s24
      %s26 = sshll.u32 [#allocation2], 4
      %s27 = int_to_ptr.vmem [resolvable:$true] %s26
      %32 = dma.hbm_to_vmem [thread:$0]  %s3, 256, %s27, [#allocation3], 64, 64, 4
    $region17: #{tpu_custom_call.1} parent=1 // pred_fallthru
      _
    // Predicated region
    $region18: #{tpu_custom_call.1} parent=1 // pred_check
      _
    $region19: #{tpu_custom_call.1} parent=1 // pred_check_branch
      %34 = sbr.rel (0) target = $region21
    $region20: #{tpu_custom_call.1} parent=1 // pred_region
      %s36 = ssub.s32 256, 256
      %37 = vsyncadd [#allocation6], %s36
      %s38 = sshll.u32 [#allocation5], 4
      %s39 = int_to_ptr.vmem [resolvable:$true] %s38
      %44 = dma.hbm_to_vmem [thread:$0]  %s4, 256, %s39, [#allocation6], 64, 64, 4
    $region21: #{tpu_custom_call.1} parent=1 // pred_fallthru
      _
    // Predicated region
    $region22: #{tpu_custom_call.1} parent=1 // pred_check
      _
    $region23: #{tpu_custom_call.1} parent=1 // pred_check_branch
      %46 = sbr.rel (0) target = $region25
    $region24: #{tpu_custom_call.1} parent=1 // pred_region
      _
    $region25: #{tpu_custom_call.1} parent=1 // pred_fallthru
      _
    // Predicated region
    $region26: #{tpu_custom_call.1} parent=1 // pred_check
      _
    $region27: #{tpu_custom_call.1} parent=1 // pred_check_branch
      %48 = sbr.rel (0) target = $region29
    $region28: #{tpu_custom_call.1} parent=1 // pred_region
      _
    $region29: #{tpu_custom_call.1} parent=1 // pred_fallthru
      _
    // Predicated region
    $region30: #{tpu_custom_call.1} parent=1 // pred_check
      _
    $region31: #{tpu_custom_call.1} parent=1 // pred_check_branch
      %50 = sbr.rel (0) target = $region33
    $region32: #{tpu_custom_call.1} parent=1 // pred_region
      %51 = dma.done [#allocation3], 256
    $region33: #{tpu_custom_call.1} parent=1 // pred_fallthru
      _
    // Predicated region
    $region34: #{tpu_custom_call.1} parent=1 // pred_check
      _
    $region35: #{tpu_custom_call.1} parent=1 // pred_check_branch
      %53 = sbr.rel (0) target = $region37
    $region36: #{tpu_custom_call.1} parent=1 // pred_region
      %54 = dma.done [#allocation6], 256
    $region37: #{tpu_custom_call.1} parent=1 // pred_fallthru
      _
    %v56 = vld [vmem:[%s0] sm:$0xff]
    %v57 = vld [vmem:[%s0 + $0x8] sm:$0xff]
    %v58 = vld [vmem:[%s6] sm:$0xff]
    %v59 = vpack.c.bf16 %v57, %v56
    %v60 = vld [vmem:[%s2] sm:$0xf]
    %v61 = vld [vmem:[%s2 + $0x4] sm:$0xf]
    %v62 = vld [vmem:[%s2 + $0x8] sm:$0xf]
    %v63 = vld [vmem:[%s2 + $0xc] sm:$0xf]
    %v64 = vlaneseq
    %v65 = vshrl.u32 %v64, 7
    %v66 = vsub.s32 0, %v65
    %v67 = vrot.slane %v58, %v66
    %v72 = vunpack.c.l.b16 %v60
    %v73 = vunpack.c.l.b16 %v61
    %v74 = vunpack.c.l.b16 %v62
    %v75 = vunpack.c.l.b16 %v63
    %v76 = vpack.c.b16 %v73, %v72
    %v77 = vpack.c.b16 %v75, %v74
    %vm80 = vcmask 261120
    %v82 = vsel %vm80, %v59, 0
    %84 = vmatprep.subr.bf16.mxu0 0
    %85 = vmatpush1.bf16.msra.mxu0 0
    %86 = vmatprep.subr.bf16.mxu0 0
    %87 = vmatpush1.bf16.msra.mxu0 0
    %88 = vmatprep.subr.bf16.mxu0 0
    %89 = vmatpush1.bf16.msra.mxu0 0
    %90 = vmatprep.subr.bf16.mxu0 0
    %91 = vmatpush1.bf16.msra.mxu0 0
    %92 = vmatprep.subr.bf16.mxu0 0
    %93 = vmatpush1.bf16.msra.mxu0 0
    %94 = vmatprep.subr.bf16.mxu0 0
    %95 = vmatpush1.bf16.msra.mxu0 0
    %96 = vmatprep.subr.bf16.mxu0 0
    %97 = vmatpush1.bf16.msra.mxu0 %v77
    %98 = vmatprep.subr.bf16.mxu0 0
    %99 = vmatpush1.bf16.msra.mxu0 %v76
    %100 = vmatprep.subr.bf16.mxu0 0
    %101 = vmatpush2.bf16.msra.mxu0 0
    %102 = vmatprep.subr.bf16.mxu0 0
    %103 = vmatpush2.bf16.msra.mxu0 0
    %104 = vmatprep.subr.bf16.mxu0 0
    %105 = vmatpush2.bf16.msra.mxu0 0
    %106 = vmatprep.subr.bf16.mxu0 0
    %107 = vmatpush2.bf16.msra.mxu0 0
    %108 = vmatprep.subr.bf16.mxu0 0
    %109 = vmatpush2.bf16.msra.mxu0 0
    %110 = vmatprep.subr.bf16.mxu0 0
    %111 = vmatpush2.bf16.msra.mxu0 0
    %112 = vmatprep.subr.bf16.mxu0 0
    %113 = vmatpush2.bf16.msra.mxu0 0
    %114 = vmatprep.subr.bf16.mxu0 0
    %115 = vmatpush2.bf16.msra.mxu0 0
    %116 = vmatprep.mubr.bf16.mxu0 0
    %117 = vmatmul.mubr.bf16.gmra.mxu0 %v82
    %v118 = vpop.f32.mrf.mxu0
    %v119 = vadd.f32 %v67, %v118
    %v120 = vpop.f32.mrf.mxu0
    %v121 = vpop.f32.mrf.mxu0
    %v122 = vadd.f32 %v67, %v121
    %v123 = vpop.f32.mrf.mxu0
    %124 = vdwg.mxu0
    %v125 = vpack.c.bf16 %v122, %v119
    %v126 = vld [vmem:[%s1] sm:$0xff]
    %v127 = vld [vmem:[%s1 + $0x8] sm:$0xff]
    %v128 = vsub.f32 %v126, 1.0
    %v129 = vsub.f32 %v127, 1.0
    %v130 = vmul.f32 %v128, 1e+09
    %v131 = vmul.f32 %v129, 1e+09
    %v133 = vunpack.c.l.b16 %v125
    %v134 = vunpack.c.h.b16 %v125
    %v135 = vpack.c.b16 %v133, %v133
    %v136 = vpack.c.b16 %v134, %v134
    %137 = vrot.lane.b32.xlu0 %v135, 96
    %v138 = vpop.permute.xlu0 %137
    %vm139 = vcmask 64512
    %v141 = vsel %vm139, %v135, 0
    %v144 = vsel %vm139, %v138, 0
    %146 = vmatprep.subr.bf16.mxu0 0
    %147 = vmatpush1.bf16.xpose.msra.mxu0 0
    %148 = vmatprep.subr.bf16.mxu0 0
    %149 = vmatpush1.bf16.xpose.msra.mxu0 0
    %150 = vmatprep.subr.bf16.mxu0 0
    %151 = vmatpush1.bf16.xpose.msra.mxu0 0
    %152 = vmatprep.subr.bf16.mxu0 0
    %153 = vmatpush1.bf16.xpose.msra.mxu0 0
    %154 = vmatprep.subr.bf16.mxu0 0
    %155 = vmatpush1.bf16.xpose.msra.mxu0 0
    %156 = vmatprep.subr.bf16.mxu0 0
    %157 = vmatpush1.bf16.xpose.msra.mxu0 0
    %158 = vmatprep.subr.bf16.mxu0 0
    %159 = vmatpush1.bf16.xpose.msra.mxu0 0
    %160 = vmatprep.subr.bf16.mxu0 0
    %161 = vmatpush1.bf16.xpose.msra.mxu0 %v144
    %162 = vmatprep.subr.bf16.mxu0 0
    %163 = vmatpush2.bf16.xpose.msra.mxu0 0
    %164 = vmatprep.subr.bf16.mxu0 0
    %165 = vmatpush2.bf16.xpose.msra.mxu0 0
    %166 = vmatprep.subr.bf16.mxu0 0
    %167 = vmatpush2.bf16.xpose.msra.mxu0 0
    %168 = vmatprep.subr.bf16.mxu0 0
    %169 = vmatpush2.bf16.xpose.msra.mxu0 0
    %170 = vmatprep.subr.bf16.mxu0 0
    %171 = vmatpush2.bf16.xpose.msra.mxu0 0
    %172 = vmatprep.subr.bf16.mxu0 0
    %173 = vmatpush2.bf16.xpose.msra.mxu0 0
    %174 = vmatprep.subr.bf16.mxu0 0
    %175 = vmatpush2.bf16.xpose.msra.mxu0 0
    %176 = vmatprep.subr.bf16.mxu0 0
    %177 = vmatpush2.bf16.xpose.msra.mxu0 0
    %178 = vmatprep.mubr.bf16.mxu0 0
    %179 = vmatmul.mubr.bf16.gmra.mxu0 %v141
    %v180 = vpop.f32.mrf.mxu0
    %v181 = vadd.f32 %v130, %v180
    %v182 = vpop.f32.mrf.mxu0
    %v183 = vpop.f32.mrf.mxu0
    %v184 = vpop.f32.mrf.mxu0
    %185 = vdwg.mxu0
    %186 = vrot.lane.b32.xlu0 %v136, 96
    %v187 = vpop.permute.xlu0 %186
    %v189 = vsel %vm139, %v136, 0
    %v192 = vsel %vm139, %v187, 0
    %194 = vmatprep.subr.bf16.mxu0 0
    %195 = vmatpush1.bf16.xpose.msra.mxu0 0
    %196 = vmatprep.subr.bf16.mxu0 0
    %197 = vmatpush1.bf16.xpose.msra.mxu0 0
    %198 = vmatprep.subr.bf16.mxu0 0
    %199 = vmatpush1.bf16.xpose.msra.mxu0 0
    %200 = vmatprep.subr.bf16.mxu0 0
    %201 = vmatpush1.bf16.xpose.msra.mxu0 0
    %202 = vmatprep.subr.bf16.mxu0 0
    %203 = vmatpush1.bf16.xpose.msra.mxu0 0
    %204 = vmatprep.subr.bf16.mxu0 0
    %205 = vmatpush1.bf16.xpose.msra.mxu0 0
    %206 = vmatprep.subr.bf16.mxu0 0
    %207 = vmatpush1.bf16.xpose.msra.mxu0 0
    %208 = vmatprep.subr.bf16.mxu0 0
    %209 = vmatpush1.bf16.xpose.msra.mxu0 %v192
    %210 = vmatprep.subr.bf16.mxu0 0
    %211 = vmatpush2.bf16.xpose.msra.mxu0 0
    %212 = vmatprep.subr.bf16.mxu0 0
    %213 = vmatpush2.bf16.xpose.msra.mxu0 0
    %214 = vmatprep.subr.bf16.mxu0 0
    %215 = vmatpush2.bf16.xpose.msra.mxu0 0
    %216 = vmatprep.subr.bf16.mxu0 0
    %217 = vmatpush2.bf16.xpose.msra.mxu0 0
    %218 = vmatprep.subr.bf16.mxu0 0
    %219 = vmatpush2.bf16.xpose.msra.mxu0 0
    %220 = vmatprep.subr.bf16.mxu0 0
    %221 = vmatpush2.bf16.xpose.msra.mxu0 0
    %222 = vmatprep.subr.bf16.mxu0 0
    %223 = vmatpush2.bf16.xpose.msra.mxu0 0
    %224 = vmatprep.subr.bf16.mxu0 0
    %225 = vmatpush2.bf16.xpose.msra.mxu0 0
    %226 = vmatprep.mubr.bf16.mxu0 0
    %227 = vmatmul.mubr.bf16.gmra.mxu0 %v189
    %v228 = vpop.f32.mrf.mxu0
    %v229 = vadd.f32 %v131, %v228
    %v230 = vpop.f32.mrf.mxu0
    %v231 = vpop.f32.mrf.mxu0
    %v232 = vpop.f32.mrf.mxu0
    %233 = vdwg.mxu0
    %v234 = vsel %vm139, %v181, -inf
    %235 = vmax.xlane.f32.xlu0 %v234
    %v236 = vpop.xlane.xlu0 %235
    %v237 = vsel %vm139, %v229, -inf
    %238 = vmax.xlane.f32.xlu0 %v237
    %v239 = vpop.xlane.xlu0 %238
    %v240 = vsub.f32 %v181, %v236
    %v241 = vsub.f32 %v229, %v239
    %v242 = vmul.f32 %v240, 1.442695
    %v243 = vpow.pop %v242
    %v244 = vmul.f32 %v241, 1.442695
    %v245 = vpow.pop %v244
    %v246 = vsel %vm139, %v243, 0.0
    %247 = vadd.xlane.f32.xlu0 %v246
    %v248 = vpop.xlane.xlu0 %247
    %v249 = vsel %vm139, %v245, 0.0
    %250 = vadd.xlane.f32.xlu0 %v249
    %v251 = vpop.xlane.xlu0 %250
    %v252 = vrcp.pop %v248
    %v253 = vrcp.pop %v251
    %v254 = vmul.f32 %v243, %v252
    %v255 = vmul.f32 %v245, %v253
    %v256 = vpack.c.bf16 %v254, %v254
    %v257 = vpack.c.bf16 %v255, %v255
    %258 = vrot.lane.b32.xlu0 %v135, 64
    %v259 = vpop.permute.xlu0 %258
    %v261 = vsel %vm139, %v256, 0
    %vm263 = vcmask 1043456
    %v265 = vsel %vm263, %v259, 0
    %267 = vmatprep.subr.bf16.mxu0 0
    %268 = vmatpush1.bf16.msra.mxu0 0
    %269 = vmatprep.subr.bf16.mxu0 0
    %270 = vmatpush1.bf16.msra.mxu0 0
    %271 = vmatprep.subr.bf16.mxu0 0
    %272 = vmatpush1.bf16.msra.mxu0 0
    %273 = vmatprep.subr.bf16.mxu0 0
    %274 = vmatpush1.bf16.msra.mxu0 0
    %275 = vmatprep.subr.bf16.mxu0 0
    %276 = vmatpush1.bf16.msra.mxu0 0
    %277 = vmatprep.subr.bf16.mxu0 0
    %278 = vmatpush1.bf16.msra.mxu0 0
    %279 = vmatprep.subr.bf16.mxu0 0
    %280 = vmatpush1.bf16.msra.mxu0 0
    %281 = vmatprep.subr.bf16.mxu0 0
    %282 = vmatpush1.bf16.msra.mxu0 %v265
    %283 = vmatprep.subr.bf16.mxu0 0
    %284 = vmatpush2.bf16.msra.mxu0 0
    %285 = vmatprep.subr.bf16.mxu0 0
    %286 = vmatpush2.bf16.msra.mxu0 0
    %287 = vmatprep.subr.bf16.mxu0 0
    %288 = vmatpush2.bf16.msra.mxu0 0
    %289 = vmatprep.subr.bf16.mxu0 0
    %290 = vmatpush2.bf16.msra.mxu0 0
    %291 = vmatprep.subr.bf16.mxu0 0
    %292 = vmatpush2.bf16.msra.mxu0 0
    %293 = vmatprep.subr.bf16.mxu0 0
    %294 = vmatpush2.bf16.msra.mxu0 0
    %295 = vmatprep.subr.bf16.mxu0 0
    %296 = vmatpush2.bf16.msra.mxu0 0
    %297 = vmatprep.subr.bf16.mxu0 0
    %298 = vmatpush2.bf16.msra.mxu0 0
    %299 = vmatprep.mubr.bf16.mxu0 0
    %300 = vmatmul.mubr.bf16.gmra.mxu0 %v261
    %v301 = vpop.f32.mrf.mxu0
    %v302 = vadd.f32 0.0, %v301
    %v303 = vpop.f32.mrf.mxu0
    %v304 = vpop.f32.mrf.mxu0
    %v305 = vpop.f32.mrf.mxu0
    %306 = vdwg.mxu0
    %307 = vrot.lane.b32.xlu0 %v136, 64
    %v308 = vpop.permute.xlu0 %307
    %v310 = vsel %vm139, %v257, 0
    %v313 = vsel %vm263, %v308, 0
    %315 = vmatprep.subr.bf16.mxu0 0
    %316 = vmatpush1.bf16.msra.mxu0 0
    %317 = vmatprep.subr.bf16.mxu0 0
    %318 = vmatpush1.bf16.msra.mxu0 0
    %319 = vmatprep.subr.bf16.mxu0 0
    %320 = vmatpush1.bf16.msra.mxu0 0
    %321 = vmatprep.subr.bf16.mxu0 0
    %322 = vmatpush1.bf16.msra.mxu0 0
    %323 = vmatprep.subr.bf16.mxu0 0
    %324 = vmatpush1.bf16.msra.mxu0 0
    %325 = vmatprep.subr.bf16.mxu0 0
    %326 = vmatpush1.bf16.msra.mxu0 0
    %327 = vmatprep.subr.bf16.mxu0 0
    %328 = vmatpush1.bf16.msra.mxu0 0
    %329 = vmatprep.subr.bf16.mxu0 0
    %330 = vmatpush1.bf16.msra.mxu0 %v313
    %331 = vmatprep.subr.bf16.mxu0 0
    %332 = vmatpush2.bf16.msra.mxu0 0
    %333 = vmatprep.subr.bf16.mxu0 0
    %334 = vmatpush2.bf16.msra.mxu0 0
    %335 = vmatprep.subr.bf16.mxu0 0
    %336 = vmatpush2.bf16.msra.mxu0 0
    %337 = vmatprep.subr.bf16.mxu0 0
    %338 = vmatpush2.bf16.msra.mxu0 0
    %339 = vmatprep.subr.bf16.mxu0 0
    %340 = vmatpush2.bf16.msra.mxu0 0
    %341 = vmatprep.subr.bf16.mxu0 0
    %342 = vmatpush2.bf16.msra.mxu0 0
    %343 = vmatprep.subr.bf16.mxu0 0
    %344 = vmatpush2.bf16.msra.mxu0 0
    %345 = vmatprep.subr.bf16.mxu0 0
    %346 = vmatpush2.bf16.msra.mxu0 0
    %347 = vmatprep.mubr.bf16.mxu0 0
    %348 = vmatmul.mubr.bf16.gmra.mxu0 %v310
    %v349 = vpop.f32.mrf.mxu0
    %v350 = vadd.f32 0.0, %v349
    %v351 = vpop.f32.mrf.mxu0
    %v352 = vpop.f32.mrf.mxu0
    %v353 = vpop.f32.mrf.mxu0
    %354 = vdwg.mxu0
    %v355 = vpack.c.bf16 %v350, %v302
    %v356 = vld [vmem:[#allocation2] sm:$0xf]
    %v358 = vsel %vm139, %v355, 0
    %v361 = vsel %vm263, %v356, 0
    %363 = vmatprep.subr.bf16.mxu0 0
    %364 = vmatpush1.bf16.msra.mxu0 0
    %365 = vmatprep.subr.bf16.mxu0 0
    %366 = vmatpush1.bf16.msra.mxu0 0
    %367 = vmatprep.subr.bf16.mxu0 0
    %368 = vmatpush1.bf16.msra.mxu0 0
    %369 = vmatprep.subr.bf16.mxu0 0
    %370 = vmatpush1.bf16.msra.mxu0 0
    %371 = vmatprep.subr.bf16.mxu0 0
    %372 = vmatpush1.bf16.msra.mxu0 0
    %373 = vmatprep.subr.bf16.mxu0 0
    %374 = vmatpush1.bf16.msra.mxu0 0
    %375 = vmatprep.subr.bf16.mxu0 0
    %376 = vmatpush1.bf16.msra.mxu0 0
    %377 = vmatprep.subr.bf16.mxu0 0
    %378 = vmatpush1.bf16.msra.mxu0 %v361
    %379 = vmatprep.subr.bf16.mxu0 0
    %380 = vmatpush2.bf16.msra.mxu0 0
    %381 = vmatprep.subr.bf16.mxu0 0
    %382 = vmatpush2.bf16.msra.mxu0 0
    %383 = vmatprep.subr.bf16.mxu0 0
    %384 = vmatpush2.bf16.msra.mxu0 0
    %385 = vmatprep.subr.bf16.mxu0 0
    %386 = vmatpush2.bf16.msra.mxu0 0
    %387 = vmatprep.subr.bf16.mxu0 0
    %388 = vmatpush2.bf16.msra.mxu0 0
    %389 = vmatprep.subr.bf16.mxu0 0
    %390 = vmatpush2.bf16.msra.mxu0 0
    %391 = vmatprep.subr.bf16.mxu0 0
    %392 = vmatpush2.bf16.msra.mxu0 0
    %393 = vmatprep.subr.bf16.mxu0 0
    %394 = vmatpush2.bf16.msra.mxu0 0
    %395 = vmatprep.mubr.bf16.mxu0 0
    %396 = vmatmul.mubr.bf16.gmra.mxu0 %v358
    %v397 = vpop.f32.mrf.mxu0
    %v398 = vadd.f32 0.0, %v397
    %v399 = vpop.f32.mrf.mxu0
    %v400 = vpop.f32.mrf.mxu0
    %v401 = vadd.f32 0.0, %v400
    %v402 = vpop.f32.mrf.mxu0
    %403 = vdwg.mxu0
    %v404 = vlaneseq
    %v405 = vshrl.u32 %v404, 7
    %v406 = vsub.s32 2, %v405
    %v407 = vrot.slane %v58, %v406
    %v408 = vadd.f32 %v407, %v398
    %v409 = vadd.f32 %v407, %v401
    %410 = vrot.lane.b32.xlu0 %v135, 120
    %v411 = vpop.permute.xlu0 %410
    %412 = vrot.lane.b32.xlu0 %v135, 88
    %v413 = vpop.permute.xlu0 %412
    %v415 = vsel %vm139, %v411, 0
    %v418 = vsel %vm139, %v413, 0
    %420 = vmatprep.subr.bf16.mxu0 0
    %421 = vmatpush1.bf16.xpose.msra.mxu0 0
    %422 = vmatprep.subr.bf16.mxu0 0
    %423 = vmatpush1.bf16.xpose.msra.mxu0 0
    %424 = vmatprep.subr.bf16.mxu0 0
    %425 = vmatpush1.bf16.xpose.msra.mxu0 0
    %426 = vmatprep.subr.bf16.mxu0 0
    %427 = vmatpush1.bf16.xpose.msra.mxu0 0
    %428 = vmatprep.subr.bf16.mxu0 0
    %429 = vmatpush1.bf16.xpose.msra.mxu0 0
    %430 = vmatprep.subr.bf16.mxu0 0
    %431 = vmatpush1.bf16.xpose.msra.mxu0 0
    %432 = vmatprep.subr.bf16.mxu0 0
    %433 = vmatpush1.bf16.xpose.msra.mxu0 0
    %434 = vmatprep.subr.bf16.mxu0 0
    %435 = vmatpush1.bf16.xpose.msra.mxu0 %v418
    %436 = vmatprep.subr.bf16.mxu0 0
    %437 = vmatpush2.bf16.xpose.msra.mxu0 0
    %438 = vmatprep.subr.bf16.mxu0 0
    %439 = vmatpush2.bf16.xpose.msra.mxu0 0
    %440 = vmatprep.subr.bf16.mxu0 0
    %441 = vmatpush2.bf16.xpose.msra.mxu0 0
    %442 = vmatprep.subr.bf16.mxu0 0
    %443 = vmatpush2.bf16.xpose.msra.mxu0 0
    %444 = vmatprep.subr.bf16.mxu0 0
    %445 = vmatpush2.bf16.xpose.msra.mxu0 0
    %446 = vmatprep.subr.bf16.mxu0 0
    %447 = vmatpush2.bf16.xpose.msra.mxu0 0
    %448 = vmatprep.subr.bf16.mxu0 0
    %449 = vmatpush2.bf16.xpose.msra.mxu0 0
    %450 = vmatprep.subr.bf16.mxu0 0
    %451 = vmatpush2.bf16.xpose.msra.mxu0 0
    %452 = vmatprep.mubr.bf16.mxu0 0
    %453 = vmatmul.mubr.bf16.gmra.mxu0 %v415
    %v454 = vpop.f32.mrf.mxu0
    %v455 = vadd.f32 %v130, %v454
    %v456 = vpop.f32.mrf.mxu0
    %v457 = vpop.f32.mrf.mxu0
    %v458 = vpop.f32.mrf.mxu0
    %459 = vdwg.mxu0
    %460 = vrot.lane.b32.xlu0 %v136, 120
    %v461 = vpop.permute.xlu0 %460
    %462 = vrot.lane.b32.xlu0 %v136, 88
    %v463 = vpop.permute.xlu0 %462
    %v465 = vsel %vm139, %v461, 0
    %v468 = vsel %vm139, %v463, 0
    %470 = vmatprep.subr.bf16.mxu0 0
    %471 = vmatpush1.bf16.xpose.msra.mxu0 0
    %472 = vmatprep.subr.bf16.mxu0 0
    %473 = vmatpush1.bf16.xpose.msra.mxu0 0
    %474 = vmatprep.subr.bf16.mxu0 0
    %475 = vmatpush1.bf16.xpose.msra.mxu0 0
    %476 = vmatprep.subr.bf16.mxu0 0
    %477 = vmatpush1.bf16.xpose.msra.mxu0 0
    %478 = vmatprep.subr.bf16.mxu0 0
    %479 = vmatpush1.bf16.xpose.msra.mxu0 0
    %480 = vmatprep.subr.bf16.mxu0 0
    %481 = vmatpush1.bf16.xpose.msra.mxu0 0
    %482 = vmatprep.subr.bf16.mxu0 0
    %483 = vmatpush1.bf16.xpose.msra.mxu0 0
    %484 = vmatprep.subr.bf16.mxu0 0
    %485 = vmatpush1.bf16.xpose.msra.mxu0 %v468
    %486 = vmatprep.subr.bf16.mxu0 0
    %487 = vmatpush2.bf16.xpose.msra.mxu0 0
    %488 = vmatprep.subr.bf16.mxu0 0
    %489 = vmatpush2.bf16.xpose.msra.mxu0 0
    %490 = vmatprep.subr.bf16.mxu0 0
    %491 = vmatpush2.bf16.xpose.msra.mxu0 0
    %492 = vmatprep.subr.bf16.mxu0 0
    %493 = vmatpush2.bf16.xpose.msra.mxu0 0
    %494 = vmatprep.subr.bf16.mxu0 0
    %495 = vmatpush2.bf16.xpose.msra.mxu0 0
    %496 = vmatprep.subr.bf16.mxu0 0
    %497 = vmatpush2.bf16.xpose.msra.mxu0 0
    %498 = vmatprep.subr.bf16.mxu0 0
    %499 = vmatpush2.bf16.xpose.msra.mxu0 0
    %500 = vmatprep.subr.bf16.mxu0 0
    %501 = vmatpush2.bf16.xpose.msra.mxu0 0
    %502 = vmatprep.mubr.bf16.mxu0 0
    %503 = vmatmul.mubr.bf16.gmra.mxu0 %v465
    %v504 = vpop.f32.mrf.mxu0
    %v505 = vadd.f32 %v131, %v504
    %v506 = vpop.f32.mrf.mxu0
    %v507 = vpop.f32.mrf.mxu0
    %v508 = vpop.f32.mrf.mxu0
    %509 = vdwg.mxu0
    %v510 = vsel %vm139, %v455, -inf
    %511 = vmax.xlane.f32.xlu0 %v510
    %v512 = vpop.xlane.xlu0 %511
    %v513 = vsel %vm139, %v505, -inf
    %514 = vmax.xlane.f32.xlu0 %v513
    %v515 = vpop.xlane.xlu0 %514
    %v516 = vsub.f32 %v455, %v512
    %v517 = vsub.f32 %v505, %v515
    %v518 = vmul.f32 %v516, 1.442695
    %v519 = vpow.pop %v518
    %v520 = vmul.f32 %v517, 1.442695
    %v521 = vpow.pop %v520
    %v522 = vsel %vm139, %v519, 0.0
    %523 = vadd.xlane.f32.xlu0 %v522
    %v524 = vpop.xlane.xlu0 %523
    %v525 = vsel %vm139, %v521, 0.0
    %526 = vadd.xlane.f32.xlu0 %v525
    %v527 = vpop.xlane.xlu0 %526
    %v528 = vrcp.pop %v524
    %v529 = vrcp.pop %v527
    %v530 = vmul.f32 %v519, %v528
    %v531 = vmul.f32 %v521, %v529
    %v532 = vpack.c.bf16 %v530, %v530
    %v533 = vpack.c.bf16 %v531, %v531
    %534 = vrot.lane.b32.xlu0 %v135, 56
    %v535 = vpop.permute.xlu0 %534
    %v537 = vsel %vm139, %v532, 0
    %v540 = vsel %vm263, %v535, 0
    %542 = vmatprep.subr.bf16.mxu0 0
    %543 = vmatpush1.bf16.msra.mxu0 0
    %544 = vmatprep.subr.bf16.mxu0 0
    %545 = vmatpush1.bf16.msra.mxu0 0
    %546 = vmatprep.subr.bf16.mxu0 0
    %547 = vmatpush1.bf16.msra.mxu0 0
    %548 = vmatprep.subr.bf16.mxu0 0
    %549 = vmatpush1.bf16.msra.mxu0 0
    %550 = vmatprep.subr.bf16.mxu0 0
    %551 = vmatpush1.bf16.msra.mxu0 0
    %552 = vmatprep.subr.bf16.mxu0 0
    %553 = vmatpush1.bf16.msra.mxu0 0
    %554 = vmatprep.subr.bf16.mxu0 0
    %555 = vmatpush1.bf16.msra.mxu0 0
    %556 = vmatprep.subr.bf16.mxu0 0
    %557 = vmatpush1.bf16.msra.mxu0 %v540
    %558 = vmatprep.subr.bf16.mxu0 0
    %559 = vmatpush2.bf16.msra.mxu0 0
    %560 = vmatprep.subr.bf16.mxu0 0
    %561 = vmatpush2.bf16.msra.mxu0 0
    %562 = vmatprep.subr.bf16.mxu0 0
    %563 = vmatpush2.bf16.msra.mxu0 0
    %564 = vmatprep.subr.bf16.mxu0 0
    %565 = vmatpush2.bf16.msra.mxu0 0
    %566 = vmatprep.subr.bf16.mxu0 0
    %567 = vmatpush2.bf16.msra.mxu0 0
    %568 = vmatprep.subr.bf16.mxu0 0
    %569 = vmatpush2.bf16.msra.mxu0 0
    %570 = vmatprep.subr.bf16.mxu0 0
    %571 = vmatpush2.bf16.msra.mxu0 0
    %572 = vmatprep.subr.bf16.mxu0 0
    %573 = vmatpush2.bf16.msra.mxu0 0
    %574 = vmatprep.mubr.bf16.mxu0 0
    %575 = vmatmul.mubr.bf16.gmra.mxu0 %v537
    %v576 = vpop.f32.mrf.mxu0
    %v577 = vadd.f32 0.0, %v576
    %v578 = vpop.f32.mrf.mxu0
    %v579 = vpop.f32.mrf.mxu0
    %v580 = vpop.f32.mrf.mxu0
    %581 = vdwg.mxu0
    %582 = vrot.lane.b32.xlu0 %v136, 56
    %v583 = vpop.permute.xlu0 %582
    %v585 = vsel %vm139, %v533, 0
    %v588 = vsel %vm263, %v583, 0
    %590 = vmatprep.subr.bf16.mxu0 0
    %591 = vmatpush1.bf16.msra.mxu0 0
    %592 = vmatprep.subr.bf16.mxu0 0
    %593 = vmatpush1.bf16.msra.mxu0 0
    %594 = vmatprep.subr.bf16.mxu0 0
    %595 = vmatpush1.bf16.msra.mxu0 0
    %596 = vmatprep.subr.bf16.mxu0 0
    %597 = vmatpush1.bf16.msra.mxu0 0
    %598 = vmatprep.subr.bf16.mxu0 0
    %599 = vmatpush1.bf16.msra.mxu0 0
    %600 = vmatprep.subr.bf16.mxu0 0
    %601 = vmatpush1.bf16.msra.mxu0 0
    %602 = vmatprep.subr.bf16.mxu0 0
    %603 = vmatpush1.bf16.msra.mxu0 0
    %604 = vmatprep.subr.bf16.mxu0 0
    %605 = vmatpush1.bf16.msra.mxu0 %v588
    %606 = vmatprep.subr.bf16.mxu0 0
    %607 = vmatpush2.bf16.msra.mxu0 0
    %608 = vmatprep.subr.bf16.mxu0 0
    %609 = vmatpush2.bf16.msra.mxu0 0
    %610 = vmatprep.subr.bf16.mxu0 0
    %611 = vmatpush2.bf16.msra.mxu0 0
    %612 = vmatprep.subr.bf16.mxu0 0
    %613 = vmatpush2.bf16.msra.mxu0 0
    %614 = vmatprep.subr.bf16.mxu0 0
    %615 = vmatpush2.bf16.msra.mxu0 0
    %616 = vmatprep.subr.bf16.mxu0 0
    %617 = vmatpush2.bf16.msra.mxu0 0
    %618 = vmatprep.subr.bf16.mxu0 0
    %619 = vmatpush2.bf16.msra.mxu0 0
    %620 = vmatprep.subr.bf16.mxu0 0
    %621 = vmatpush2.bf16.msra.mxu0 0
    %622 = vmatprep.mubr.bf16.mxu0 0
    %623 = vmatmul.mubr.bf16.gmra.mxu0 %v585
    %v624 = vpop.f32.mrf.mxu0
    %v625 = vadd.f32 0.0, %v624
    %v626 = vpop.f32.mrf.mxu0
    %v627 = vpop.f32.mrf.mxu0
    %v628 = vpop.f32.mrf.mxu0
    %629 = vdwg.mxu0
    %v630 = vpack.c.bf16 %v625, %v577
    %s631 = scalar_lea.vmem [#allocation2], 4
    %v632 = vld [vmem:[%s631] sm:$0xf]
    %v634 = vsel %vm139, %v630, 0
    %v637 = vsel %vm263, %v632, 0
    %639 = vmatprep.subr.bf16.mxu0 0
    %640 = vmatpush1.bf16.msra.mxu0 0
    %641 = vmatprep.subr.bf16.mxu0 0
    %642 = vmatpush1.bf16.msra.mxu0 0
    %643 = vmatprep.subr.bf16.mxu0 0
    %644 = vmatpush1.bf16.msra.mxu0 0
    %645 = vmatprep.subr.bf16.mxu0 0
    %646 = vmatpush1.bf16.msra.mxu0 0
    %647 = vmatprep.subr.bf16.mxu0 0
    %648 = vmatpush1.bf16.msra.mxu0 0
    %649 = vmatprep.subr.bf16.mxu0 0
    %650 = vmatpush1.bf16.msra.mxu0 0
    %651 = vmatprep.subr.bf16.mxu0 0
    %652 = vmatpush1.bf16.msra.mxu0 0
    %653 = vmatprep.subr.bf16.mxu0 0
    %654 = vmatpush1.bf16.msra.mxu0 %v637
    %655 = vmatprep.subr.bf16.mxu0 0
    %656 = vmatpush2.bf16.msra.mxu0 0
    %657 = vmatprep.subr.bf16.mxu0 0
    %658 = vmatpush2.bf16.msra.mxu0 0
    %659 = vmatprep.subr.bf16.mxu0 0
    %660 = vmatpush2.bf16.msra.mxu0 0
    %661 = vmatprep.subr.bf16.mxu0 0
    %662 = vmatpush2.bf16.msra.mxu0 0
    %663 = vmatprep.subr.bf16.mxu0 0
    %664 = vmatpush2.bf16.msra.mxu0 0
    %665 = vmatprep.subr.bf16.mxu0 0
    %666 = vmatpush2.bf16.msra.mxu0 0
    %667 = vmatprep.subr.bf16.mxu0 0
    %668 = vmatpush2.bf16.msra.mxu0 0
    %669 = vmatprep.subr.bf16.mxu0 0
    %670 = vmatpush2.bf16.msra.mxu0 0
    %671 = vmatprep.mubr.bf16.mxu0 0
    %672 = vmatmul.mubr.bf16.gmra.mxu0 %v634
    %v673 = vpop.f32.mrf.mxu0
    %v674 = vadd.f32 0.0, %v673
    %v675 = vpop.f32.mrf.mxu0
    %v676 = vpop.f32.mrf.mxu0
    %v677 = vadd.f32 0.0, %v676
    %v678 = vpop.f32.mrf.mxu0
    %679 = vdwg.mxu0
    %v680 = vadd.f32 %v408, %v674
    %v681 = vadd.f32 %v409, %v677
    %682 = vrot.lane.b32.xlu0 %v135, 112
    %v683 = vpop.permute.xlu0 %682
    %684 = vrot.lane.b32.xlu0 %v135, 80
    %v685 = vpop.permute.xlu0 %684
    %v687 = vsel %vm139, %v683, 0
    %v690 = vsel %vm139, %v685, 0
    %692 = vmatprep.subr.bf16.mxu0 0
    %693 = vmatpush1.bf16.xpose.msra.mxu0 0
    %694 = vmatprep.subr.bf16.mxu0 0
    %695 = vmatpush1.bf16.xpose.msra.mxu0 0
    %696 = vmatprep.subr.bf16.mxu0 0
    %697 = vmatpush1.bf16.xpose.msra.mxu0 0
    %698 = vmatprep.subr.bf16.mxu0 0
    %699 = vmatpush1.bf16.xpose.msra.mxu0 0
    %700 = vmatprep.subr.bf16.mxu0 0
    %701 = vmatpush1.bf16.xpose.msra.mxu0 0
    %702 = vmatprep.subr.bf16.mxu0 0
    %703 = vmatpush1.bf16.xpose.msra.mxu0 0
    %704 = vmatprep.subr.bf16.mxu0 0
    %705 = vmatpush1.bf16.xpose.msra.mxu0 0
    %706 = vmatprep.subr.bf16.mxu0 0
    %707 = vmatpush1.bf16.xpose.msra.mxu0 %v690
    %708 = vmatprep.subr.bf16.mxu0 0
    %709 = vmatpush2.bf16.xpose.msra.mxu0 0
    %710 = vmatprep.subr.bf16.mxu0 0
    %711 = vmatpush2.bf16.xpose.msra.mxu0 0
    %712 = vmatprep.subr.bf16.mxu0 0
    %713 = vmatpush2.bf16.xpose.msra.mxu0 0
    %714 = vmatprep.subr.bf16.mxu0 0
    %715 = vmatpush2.bf16.xpose.msra.mxu0 0
    %716 = vmatprep.subr.bf16.mxu0 0
    %717 = vmatpush2.bf16.xpose.msra.mxu0 0
    %718 = vmatprep.subr.bf16.mxu0 0
    %719 = vmatpush2.bf16.xpose.msra.mxu0 0
    %720 = vmatprep.subr.bf16.mxu0 0
    %721 = vmatpush2.bf16.xpose.msra.mxu0 0
    %722 = vmatprep.subr.bf16.mxu0 0
    %723 = vmatpush2.bf16.xpose.msra.mxu0 0
    %724 = vmatprep.mubr.bf16.mxu0 0
    %725 = vmatmul.mubr.bf16.gmra.mxu0 %v687
    %v726 = vpop.f32.mrf.mxu0
    %v727 = vadd.f32 %v130, %v726
    %v728 = vpop.f32.mrf.mxu0
    %v729 = vpop.f32.mrf.mxu0
    %v730 = vpop.f32.mrf.mxu0
    %731 = vdwg.mxu0
    %732 = vrot.lane.b32.xlu0 %v136, 112
    %v733 = vpop.permute.xlu0 %732
    %734 = vrot.lane.b32.xlu0 %v136, 80
    %v735 = vpop.permute.xlu0 %734
    %v737 = vsel %vm139, %v733, 0
    %v740 = vsel %vm139, %v735, 0
    %742 = vmatprep.subr.bf16.mxu0 0
    %743 = vmatpush1.bf16.xpose.msra.mxu0 0
    %744 = vmatprep.subr.bf16.mxu0 0
    %745 = vmatpush1.bf16.xpose.msra.mxu0 0
    %746 = vmatprep.subr.bf16.mxu0 0
    %747 = vmatpush1.bf16.xpose.msra.mxu0 0
    %748 = vmatprep.subr.bf16.mxu0 0
    %749 = vmatpush1.bf16.xpose.msra.mxu0 0
    %750 = vmatprep.subr.bf16.mxu0 0
    %751 = vmatpush1.bf16.xpose.msra.mxu0 0
    %752 = vmatprep.subr.bf16.mxu0 0
    %753 = vmatpush1.bf16.xpose.msra.mxu0 0
    %754 = vmatprep.subr.bf16.mxu0 0
    %755 = vmatpush1.bf16.xpose.msra.mxu0 0
    %756 = vmatprep.subr.bf16.mxu0 0
    %757 = vmatpush1.bf16.xpose.msra.mxu0 %v740
    %758 = vmatprep.subr.bf16.mxu0 0
    %759 = vmatpush2.bf16.xpose.msra.mxu0 0
    %760 = vmatprep.subr.bf16.mxu0 0
    %761 = vmatpush2.bf16.xpose.msra.mxu0 0
    %762 = vmatprep.subr.bf16.mxu0 0
    %763 = vmatpush2.bf16.xpose.msra.mxu0 0
    %764 = vmatprep.subr.bf16.mxu0 0
    %765 = vmatpush2.bf16.xpose.msra.mxu0 0
    %766 = vmatprep.subr.bf16.mxu0 0
    %767 = vmatpush2.bf16.xpose.msra.mxu0 0
    %768 = vmatprep.subr.bf16.mxu0 0
    %769 = vmatpush2.bf16.xpose.msra.mxu0 0
    %770 = vmatprep.subr.bf16.mxu0 0
    %771 = vmatpush2.bf16.xpose.msra.mxu0 0
    %772 = vmatprep.subr.bf16.mxu0 0
    %773 = vmatpush2.bf16.xpose.msra.mxu0 0
    %774 = vmatprep.mubr.bf16.mxu0 0
    %775 = vmatmul.mubr.bf16.gmra.mxu0 %v737
    %v776 = vpop.f32.mrf.mxu0
    %v777 = vadd.f32 %v131, %v776
    %v778 = vpop.f32.mrf.mxu0
    %v779 = vpop.f32.mrf.mxu0
    %v780 = vpop.f32.mrf.mxu0
    %781 = vdwg.mxu0
    %v782 = vsel %vm139, %v727, -inf
    %783 = vmax.xlane.f32.xlu0 %v782
    %v784 = vpop.xlane.xlu0 %783
    %v785 = vsel %vm139, %v777, -inf
    %786 = vmax.xlane.f32.xlu0 %v785
    %v787 = vpop.xlane.xlu0 %786
    %v788 = vsub.f32 %v727, %v784
    %v789 = vsub.f32 %v777, %v787
    %v790 = vmul.f32 %v788, 1.442695
    %v791 = vpow.pop %v790
    %v792 = vmul.f32 %v789, 1.442695
    %v793 = vpow.pop %v792
    %v794 = vsel %vm139, %v791, 0.0
    %795 = vadd.xlane.f32.xlu0 %v794
    %v796 = vpop.xlane.xlu0 %795
    %v797 = vsel %vm139, %v793, 0.0
    %798 = vadd.xlane.f32.xlu0 %v797
    %v799 = vpop.xlane.xlu0 %798
    %v800 = vrcp.pop %v796
    %v801 = vrcp.pop %v799
    %v802 = vmul.f32 %v791, %v800
    %v803 = vmul.f32 %v793, %v801
    %v804 = vpack.c.bf16 %v802, %v802
    %v805 = vpack.c.bf16 %v803, %v803
    %806 = vrot.lane.b32.xlu0 %v135, 48
    %v807 = vpop.permute.xlu0 %806
    %v809 = vsel %vm139, %v804, 0
    %v812 = vsel %vm263, %v807, 0
    %814 = vmatprep.subr.bf16.mxu0 0
    %815 = vmatpush1.bf16.msra.mxu0 0
    %816 = vmatprep.subr.bf16.mxu0 0
    %817 = vmatpush1.bf16.msra.mxu0 0
    %818 = vmatprep.subr.bf16.mxu0 0
    %819 = vmatpush1.bf16.msra.mxu0 0
    %820 = vmatprep.subr.bf16.mxu0 0
    %821 = vmatpush1.bf16.msra.mxu0 0
    %822 = vmatprep.subr.bf16.mxu0 0
    %823 = vmatpush1.bf16.msra.mxu0 0
    %824 = vmatprep.subr.bf16.mxu0 0
    %825 = vmatpush1.bf16.msra.mxu0 0
    %826 = vmatprep.subr.bf16.mxu0 0
    %827 = vmatpush1.bf16.msra.mxu0 0
    %828 = vmatprep.subr.bf16.mxu0 0
    %829 = vmatpush1.bf16.msra.mxu0 %v812
    %830 = vmatprep.subr.bf16.mxu0 0
    %831 = vmatpush2.bf16.msra.mxu0 0
    %832 = vmatprep.subr.bf16.mxu0 0
    %833 = vmatpush2.bf16.msra.mxu0 0
    %834 = vmatprep.subr.bf16.mxu0 0
    %835 = vmatpush2.bf16.msra.mxu0 0
    %836 = vmatprep.subr.bf16.mxu0 0
    %837 = vmatpush2.bf16.msra.mxu0 0
    %838 = vmatprep.subr.bf16.mxu0 0
    %839 = vmatpush2.bf16.msra.mxu0 0
    %840 = vmatprep.subr.bf16.mxu0 0
    %841 = vmatpush2.bf16.msra.mxu0 0
    %842 = vmatprep.subr.bf16.mxu0 0
    %843 = vmatpush2.bf16.msra.mxu0 0
    %844 = vmatprep.subr.bf16.mxu0 0
    %845 = vmatpush2.bf16.msra.mxu0 0
    %846 = vmatprep.mubr.bf16.mxu0 0
    %847 = vmatmul.mubr.bf16.gmra.mxu0 %v809
    %v848 = vpop.f32.mrf.mxu0
    %v849 = vadd.f32 0.0, %v848
    %v850 = vpop.f32.mrf.mxu0
    %v851 = vpop.f32.mrf.mxu0
    %v852 = vpop.f32.mrf.mxu0
    %853 = vdwg.mxu0
    %854 = vrot.lane.b32.xlu0 %v136, 48
    %v855 = vpop.permute.xlu0 %854
    %v857 = vsel %vm139, %v805, 0
    %v860 = vsel %vm263, %v855, 0
    %862 = vmatprep.subr.bf16.mxu0 0
    %863 = vmatpush1.bf16.msra.mxu0 0
    %864 = vmatprep.subr.bf16.mxu0 0
    %865 = vmatpush1.bf16.msra.mxu0 0
    %866 = vmatprep.subr.bf16.mxu0 0
    %867 = vmatpush1.bf16.msra.mxu0 0
    %868 = vmatprep.subr.bf16.mxu0 0
    %869 = vmatpush1.bf16.msra.mxu0 0
    %870 = vmatprep.subr.bf16.mxu0 0
    %871 = vmatpush1.bf16.msra.mxu0 0
    %872 = vmatprep.subr.bf16.mxu0 0
    %873 = vmatpush1.bf16.msra.mxu0 0
    %874 = vmatprep.subr.bf16.mxu0 0
    %875 = vmatpush1.bf16.msra.mxu0 0
    %876 = vmatprep.subr.bf16.mxu0 0
    %877 = vmatpush1.bf16.msra.mxu0 %v860
    %878 = vmatprep.subr.bf16.mxu0 0
    %879 = vmatpush2.bf16.msra.mxu0 0
    %880 = vmatprep.subr.bf16.mxu0 0
    %881 = vmatpush2.bf16.msra.mxu0 0
    %882 = vmatprep.subr.bf16.mxu0 0
    %883 = vmatpush2.bf16.msra.mxu0 0
    %884 = vmatprep.subr.bf16.mxu0 0
    %885 = vmatpush2.bf16.msra.mxu0 0
    %886 = vmatprep.subr.bf16.mxu0 0
    %887 = vmatpush2.bf16.msra.mxu0 0
    %888 = vmatprep.subr.bf16.mxu0 0
    %889 = vmatpush2.bf16.msra.mxu0 0
    %890 = vmatprep.subr.bf16.mxu0 0
    %891 = vmatpush2.bf16.msra.mxu0 0
    %892 = vmatprep.subr.bf16.mxu0 0
    %893 = vmatpush2.bf16.msra.mxu0 0
    %894 = vmatprep.mubr.bf16.mxu0 0
    %895 = vmatmul.mubr.bf16.gmra.mxu0 %v857
    %v896 = vpop.f32.mrf.mxu0
    %v897 = vadd.f32 0.0, %v896
    %v898 = vpop.f32.mrf.mxu0
    %v899 = vpop.f32.mrf.mxu0
    %v900 = vpop.f32.mrf.mxu0
    %901 = vdwg.mxu0
    %v902 = vpack.c.bf16 %v897, %v849
    %s903 = scalar_lea.vmem [#allocation2], 8
    %v904 = vld [vmem:[%s903] sm:$0xf]
    %v906 = vsel %vm139, %v902, 0
    %v909 = vsel %vm263, %v904, 0
    %911 = vmatprep.subr.bf16.mxu0 0
    %912 = vmatpush1.bf16.msra.mxu0 0
    %913 = vmatprep.subr.bf16.mxu0 0
    %914 = vmatpush1.bf16.msra.mxu0 0
    %915 = vmatprep.subr.bf16.mxu0 0
    %916 = vmatpush1.bf16.msra.mxu0 0
    %917 = vmatprep.subr.bf16.mxu0 0
    %918 = vmatpush1.bf16.msra.mxu0 0
    %919 = vmatprep.subr.bf16.mxu0 0
    %920 = vmatpush1.bf16.msra.mxu0 0
    %921 = vmatprep.subr.bf16.mxu0 0
    %922 = vmatpush1.bf16.msra.mxu0 0
    %923 = vmatprep.subr.bf16.mxu0 0
    %924 = vmatpush1.bf16.msra.mxu0 0
    %925 = vmatprep.subr.bf16.mxu0 0
    %926 = vmatpush1.bf16.msra.mxu0 %v909
    %927 = vmatprep.subr.bf16.mxu0 0
    %928 = vmatpush2.bf16.msra.mxu0 0
    %929 = vmatprep.subr.bf16.mxu0 0
    %930 = vmatpush2.bf16.msra.mxu0 0
    %931 = vmatprep.subr.bf16.mxu0 0
    %932 = vmatpush2.bf16.msra.mxu0 0
    %933 = vmatprep.subr.bf16.mxu0 0
    %934 = vmatpush2.bf16.msra.mxu0 0
    %935 = vmatprep.subr.bf16.mxu0 0
    %936 = vmatpush2.bf16.msra.mxu0 0
    %937 = vmatprep.subr.bf16.mxu0 0
    %938 = vmatpush2.bf16.msra.mxu0 0
    %939 = vmatprep.subr.bf16.mxu0 0
    %940 = vmatpush2.bf16.msra.mxu0 0
    %941 = vmatprep.subr.bf16.mxu0 0
    %942 = vmatpush2.bf16.msra.mxu0 0
    %943 = vmatprep.mubr.bf16.mxu0 0
    %944 = vmatmul.mubr.bf16.gmra.mxu0 %v906
    %v945 = vpop.f32.mrf.mxu0
    %v946 = vadd.f32 0.0, %v945
    %v947 = vpop.f32.mrf.mxu0
    %v948 = vpop.f32.mrf.mxu0
    %v949 = vadd.f32 0.0, %v948
    %v950 = vpop.f32.mrf.mxu0
    %951 = vdwg.mxu0
    %v952 = vadd.f32 %v680, %v946
    %v953 = vadd.f32 %v681, %v949
    %954 = vrot.lane.b32.xlu0 %v135, 104
    %v955 = vpop.permute.xlu0 %954
    %956 = vrot.lane.b32.xlu0 %v135, 72
    %v957 = vpop.permute.xlu0 %956
    %v959 = vsel %vm139, %v955, 0
    %v962 = vsel %vm139, %v957, 0
    %964 = vmatprep.subr.bf16.mxu0 0
    %965 = vmatpush1.bf16.xpose.msra.mxu0 0
    %966 = vmatprep.subr.bf16.mxu0 0
    %967 = vmatpush1.bf16.xpose.msra.mxu0 0
    %968 = vmatprep.subr.bf16.mxu0 0
    %969 = vmatpush1.bf16.xpose.msra.mxu0 0
    %970 = vmatprep.subr.bf16.mxu0 0
    %971 = vmatpush1.bf16.xpose.msra.mxu0 0
    %972 = vmatprep.subr.bf16.mxu0 0
    %973 = vmatpush1.bf16.xpose.msra.mxu0 0
    %974 = vmatprep.subr.bf16.mxu0 0
    %975 = vmatpush1.bf16.xpose.msra.mxu0 0
    %976 = vmatprep.subr.bf16.mxu0 0
    %977 = vmatpush1.bf16.xpose.msra.mxu0 0
    %978 = vmatprep.subr.bf16.mxu0 0
    %979 = vmatpush1.bf16.xpose.msra.mxu0 %v962
    %980 = vmatprep.subr.bf16.mxu0 0
    %981 = vmatpush2.bf16.xpose.msra.mxu0 0
    %982 = vmatprep.subr.bf16.mxu0 0
    %983 = vmatpush2.bf16.xpose.msra.mxu0 0
    %984 = vmatprep.subr.bf16.mxu0 0
    %985 = vmatpush2.bf16.xpose.msra.mxu0 0
    %986 = vmatprep.subr.bf16.mxu0 0
    %987 = vmatpush2.bf16.xpose.msra.mxu0 0
    %988 = vmatprep.subr.bf16.mxu0 0
    %989 = vmatpush2.bf16.xpose.msra.mxu0 0
    %990 = vmatprep.subr.bf16.mxu0 0
    %991 = vmatpush2.bf16.xpose.msra.mxu0 0
    %992 = vmatprep.subr.bf16.mxu0 0
    %993 = vmatpush2.bf16.xpose.msra.mxu0 0
    %994 = vmatprep.subr.bf16.mxu0 0
    %995 = vmatpush2.bf16.xpose.msra.mxu0 0
    %996 = vmatprep.mubr.bf16.mxu0 0
    %997 = vmatmul.mubr.bf16.gmra.mxu0 %v959
    %v998 = vpop.f32.mrf.mxu0
    %v999 = vadd.f32 %v130, %v998
    %v1000 = vpop.f32.mrf.mxu0
    %v1001 = vpop.f32.mrf.mxu0
    %v1002 = vpop.f32.mrf.mxu0
    %1003 = vdwg.mxu0
    %1004 = vrot.lane.b32.xlu0 %v136, 104
    %v1005 = vpop.permute.xlu0 %1004
    %1006 = vrot.lane.b32.xlu0 %v136, 72
    %v1007 = vpop.permute.xlu0 %1006
    %v1009 = vsel %vm139, %v1005, 0
    %v1012 = vsel %vm139, %v1007, 0
    %1014 = vmatprep.subr.bf16.mxu0 0
    %1015 = vmatpush1.bf16.xpose.msra.mxu0 0
    %1016 = vmatprep.subr.bf16.mxu0 0
    %1017 = vmatpush1.bf16.xpose.msra.mxu0 0
    %1018 = vmatprep.subr.bf16.mxu0 0
    %1019 = vmatpush1.bf16.xpose.msra.mxu0 0
    %1020 = vmatprep.subr.bf16.mxu0 0
    %1021 = vmatpush1.bf16.xpose.msra.mxu0 0
    %1022 = vmatprep.subr.bf16.mxu0 0
    %1023 = vmatpush1.bf16.xpose.msra.mxu0 0
    %1024 = vmatprep.subr.bf16.mxu0 0
    %1025 = vmatpush1.bf16.xpose.msra.mxu0 0
    %1026 = vmatprep.subr.bf16.mxu0 0
    %1027 = vmatpush1.bf16.xpose.msra.mxu0 0
    %1028 = vmatprep.subr.bf16.mxu0 0
    %1029 = vmatpush1.bf16.xpose.msra.mxu0 %v1012
    %1030 = vmatprep.subr.bf16.mxu0 0
    %1031 = vmatpush2.bf16.xpose.msra.mxu0 0
    %1032 = vmatprep.subr.bf16.mxu0 0
    %1033 = vmatpush2.bf16.xpose.msra.mxu0 0
    %1034 = vmatprep.subr.bf16.mxu0 0
    %1035 = vmatpush2.bf16.xpose.msra.mxu0 0
    %1036 = vmatprep.subr.bf16.mxu0 0
    %1037 = vmatpush2.bf16.xpose.msra.mxu0 0
    %1038 = vmatprep.subr.bf16.mxu0 0
    %1039 = vmatpush2.bf16.xpose.msra.mxu0 0
    %1040 = vmatprep.subr.bf16.mxu0 0
    %1041 = vmatpush2.bf16.xpose.msra.mxu0 0
    %1042 = vmatprep.subr.bf16.mxu0 0
    %1043 = vmatpush2.bf16.xpose.msra.mxu0 0
    %1044 = vmatprep.subr.bf16.mxu0 0
    %1045 = vmatpush2.bf16.xpose.msra.mxu0 0
    %1046 = vmatprep.mubr.bf16.mxu0 0
    %1047 = vmatmul.mubr.bf16.gmra.mxu0 %v1009
    %v1048 = vpop.f32.mrf.mxu0
    %v1049 = vadd.f32 %v131, %v1048
    %v1050 = vpop.f32.mrf.mxu0
    %v1051 = vpop.f32.mrf.mxu0
    %v1052 = vpop.f32.mrf.mxu0
    %1053 = vdwg.mxu0
    %v1054 = vsel %vm139, %v999, -inf
    %1055 = vmax.xlane.f32.xlu0 %v1054
    %v1056 = vpop.xlane.xlu0 %1055
    %v1057 = vsel %vm139, %v1049, -inf
    %1058 = vmax.xlane.f32.xlu0 %v1057
    %v1059 = vpop.xlane.xlu0 %1058
    %v1060 = vsub.f32 %v999, %v1056
    %v1061 = vsub.f32 %v1049, %v1059
    %v1062 = vmul.f32 %v1060, 1.442695
    %v1063 = vpow.pop %v1062
    %v1064 = vmul.f32 %v1061, 1.442695
    %v1065 = vpow.pop %v1064
    %v1066 = vsel %vm139, %v1063, 0.0
    %1067 = vadd.xlane.f32.xlu0 %v1066
    %v1068 = vpop.xlane.xlu0 %1067
    %v1069 = vsel %vm139, %v1065, 0.0
    %1070 = vadd.xlane.f32.xlu0 %v1069
    %v1071 = vpop.xlane.xlu0 %1070
    %v1072 = vrcp.pop %v1068
    %v1073 = vrcp.pop %v1071
    %v1074 = vmul.f32 %v1063, %v1072
    %v1075 = vmul.f32 %v1065, %v1073
    %v1076 = vpack.c.bf16 %v1074, %v1074
    %v1077 = vpack.c.bf16 %v1075, %v1075
    %1078 = vrot.lane.b32.xlu0 %v135, 40
    %v1079 = vpop.permute.xlu0 %1078
    %v1081 = vsel %vm139, %v1076, 0
    %v1084 = vsel %vm263, %v1079, 0
    %1086 = vmatprep.subr.bf16.mxu0 0
    %1087 = vmatpush1.bf16.msra.mxu0 0
    %1088 = vmatprep.subr.bf16.mxu0 0
    %1089 = vmatpush1.bf16.msra.mxu0 0
    %1090 = vmatprep.subr.bf16.mxu0 0
    %1091 = vmatpush1.bf16.msra.mxu0 0
    %1092 = vmatprep.subr.bf16.mxu0 0
    %1093 = vmatpush1.bf16.msra.mxu0 0
    %1094 = vmatprep.subr.bf16.mxu0 0
    %1095 = vmatpush1.bf16.msra.mxu0 0
    %1096 = vmatprep.subr.bf16.mxu0 0
    %1097 = vmatpush1.bf16.msra.mxu0 0
    %1098 = vmatprep.subr.bf16.mxu0 0
    %1099 = vmatpush1.bf16.msra.mxu0 0
    %1100 = vmatprep.subr.bf16.mxu0 0
    %1101 = vmatpush1.bf16.msra.mxu0 %v1084
    %1102 = vmatprep.subr.bf16.mxu0 0
    %1103 = vmatpush2.bf16.msra.mxu0 0
    %1104 = vmatprep.subr.bf16.mxu0 0
    %1105 = vmatpush2.bf16.msra.mxu0 0
    %1106 = vmatprep.subr.bf16.mxu0 0
    %1107 = vmatpush2.bf16.msra.mxu0 0
    %1108 = vmatprep.subr.bf16.mxu0 0
    %1109 = vmatpush2.bf16.msra.mxu0 0
    %1110 = vmatprep.subr.bf16.mxu0 0
    %1111 = vmatpush2.bf16.msra.mxu0 0
    %1112 = vmatprep.subr.bf16.mxu0 0
    %1113 = vmatpush2.bf16.msra.mxu0 0
    %1114 = vmatprep.subr.bf16.mxu0 0
    %1115 = vmatpush2.bf16.msra.mxu0 0
    %1116 = vmatprep.subr.bf16.mxu0 0
    %1117 = vmatpush2.bf16.msra.mxu0 0
    %1118 = vmatprep.mubr.bf16.mxu0 0
    %1119 = vmatmul.mubr.bf16.gmra.mxu0 %v1081
    %v1120 = vpop.f32.mrf.mxu0
    %v1121 = vadd.f32 0.0, %v1120
    %v1122 = vpop.f32.mrf.mxu0
    %v1123 = vpop.f32.mrf.mxu0
    %v1124 = vpop.f32.mrf.mxu0
    %1125 = vdwg.mxu0
    %1126 = vrot.lane.b32.xlu0 %v136, 40
    %v1127 = vpop.permute.xlu0 %1126
    %v1129 = vsel %vm139, %v1077, 0
    %v1132 = vsel %vm263, %v1127, 0
    %1134 = vmatprep.subr.bf16.mxu0 0
    %1135 = vmatpush1.bf16.msra.mxu0 0
    %1136 = vmatprep.subr.bf16.mxu0 0
    %1137 = vmatpush1.bf16.msra.mxu0 0
    %1138 = vmatprep.subr.bf16.mxu0 0
    %1139 = vmatpush1.bf16.msra.mxu0 0
    %1140 = vmatprep.subr.bf16.mxu0 0
    %1141 = vmatpush1.bf16.msra.mxu0 0
    %1142 = vmatprep.subr.bf16.mxu0 0
    %1143 = vmatpush1.bf16.msra.mxu0 0
    %1144 = vmatprep.subr.bf16.mxu0 0
    %1145 = vmatpush1.bf16.msra.mxu0 0
    %1146 = vmatprep.subr.bf16.mxu0 0
    %1147 = vmatpush1.bf16.msra.mxu0 0
    %1148 = vmatprep.subr.bf16.mxu0 0
    %1149 = vmatpush1.bf16.msra.mxu0 %v1132
    %1150 = vmatprep.subr.bf16.mxu0 0
    %1151 = vmatpush2.bf16.msra.mxu0 0
    %1152 = vmatprep.subr.bf16.mxu0 0
    %1153 = vmatpush2.bf16.msra.mxu0 0
    %1154 = vmatprep.subr.bf16.mxu0 0
    %1155 = vmatpush2.bf16.msra.mxu0 0
    %1156 = vmatprep.subr.bf16.mxu0 0
    %1157 = vmatpush2.bf16.msra.mxu0 0
    %1158 = vmatprep.subr.bf16.mxu0 0
    %1159 = vmatpush2.bf16.msra.mxu0 0
    %1160 = vmatprep.subr.bf16.mxu0 0
    %1161 = vmatpush2.bf16.msra.mxu0 0
    %1162 = vmatprep.subr.bf16.mxu0 0
    %1163 = vmatpush2.bf16.msra.mxu0 0
    %1164 = vmatprep.subr.bf16.mxu0 0
    %1165 = vmatpush2.bf16.msra.mxu0 0
    %1166 = vmatprep.mubr.bf16.mxu0 0
    %1167 = vmatmul.mubr.bf16.gmra.mxu0 %v1129
    %v1168 = vpop.f32.mrf.mxu0
    %v1169 = vadd.f32 0.0, %v1168
    %v1170 = vpop.f32.mrf.mxu0
    %v1171 = vpop.f32.mrf.mxu0
    %v1172 = vpop.f32.mrf.mxu0
    %1173 = vdwg.mxu0
    %v1174 = vpack.c.bf16 %v1169, %v1121
    %s1175 = scalar_lea.vmem [#allocation2], 12
    %v1176 = vld [vmem:[%s1175] sm:$0xf]
    %v1178 = vsel %vm139, %v1174, 0
    %v1181 = vsel %vm263, %v1176, 0
    %1183 = vmatprep.subr.bf16.mxu0 0
    %1184 = vmatpush1.bf16.msra.mxu0 0
    %1185 = vmatprep.subr.bf16.mxu0 0
    %1186 = vmatpush1.bf16.msra.mxu0 0
    %1187 = vmatprep.subr.bf16.mxu0 0
    %1188 = vmatpush1.bf16.msra.mxu0 0
    %1189 = vmatprep.subr.bf16.mxu0 0
    %1190 = vmatpush1.bf16.msra.mxu0 0
    %1191 = vmatprep.subr.bf16.mxu0 0
    %1192 = vmatpush1.bf16.msra.mxu0 0
    %1193 = vmatprep.subr.bf16.mxu0 0
    %1194 = vmatpush1.bf16.msra.mxu0 0
    %1195 = vmatprep.subr.bf16.mxu0 0
    %1196 = vmatpush1.bf16.msra.mxu0 0
    %1197 = vmatprep.subr.bf16.mxu0 0
    %1198 = vmatpush1.bf16.msra.mxu0 %v1181
    %1199 = vmatprep.subr.bf16.mxu0 0
    %1200 = vmatpush2.bf16.msra.mxu0 0
    %1201 = vmatprep.subr.bf16.mxu0 0
    %1202 = vmatpush2.bf16.msra.mxu0 0
    %1203 = vmatprep.subr.bf16.mxu0 0
    %1204 = vmatpush2.bf16.msra.mxu0 0
    %1205 = vmatprep.subr.bf16.mxu0 0
    %1206 = vmatpush2.bf16.msra.mxu0 0
    %1207 = vmatprep.subr.bf16.mxu0 0
    %1208 = vmatpush2.bf16.msra.mxu0 0
    %1209 = vmatprep.subr.bf16.mxu0 0
    %1210 = vmatpush2.bf16.msra.mxu0 0
    %1211 = vmatprep.subr.bf16.mxu0 0
    %1212 = vmatpush2.bf16.msra.mxu0 0
    %1213 = vmatprep.subr.bf16.mxu0 0
    %1214 = vmatpush2.bf16.msra.mxu0 0
    %1215 = vmatprep.mubr.bf16.mxu0 0
    %1216 = vmatmul.mubr.bf16.gmra.mxu0 %v1178
    %v1217 = vpop.f32.mrf.mxu0
    %v1218 = vadd.f32 0.0, %v1217
    %v1219 = vpop.f32.mrf.mxu0
    %v1220 = vpop.f32.mrf.mxu0
    %v1221 = vadd.f32 0.0, %v1220
    %v1222 = vpop.f32.mrf.mxu0
    %1223 = vdwg.mxu0
    %v1224 = vadd.f32 %v952, %v1218
    %v1225 = vadd.f32 %v953, %v1221
    %v1226 = vadd.f32 %v56, %v1224
    %v1227 = vadd.f32 %v57, %v1225
    %v1228 = vsel %vm80, %v1226, 0.0
    %1229 = vadd.xlane.f32.xlu0 %v1228
    %v1230 = vpop.xlane.xlu0 %1229
    %v1231 = vsel %vm80, %v1227, 0.0
    %1232 = vadd.xlane.f32.xlu0 %v1231
    %v1233 = vpop.xlane.xlu0 %1232
    %v1234 = vrcp.pop 32.0
    %v1235 = vmul.f32 %v1230, %v1234
    %v1236 = vmul.f32 %v1233, %v1234
    %v1237 = vsub.f32 %v1226, %v1235
    %v1238 = vsub.f32 %v1227, %v1236
    %v1239 = vmul.f32 %v1237, %v1237
    %v1240 = vmul.f32 %v1238, %v1238
    %v1241 = vsel %vm80, %v1239, 0.0
    %1242 = vadd.xlane.f32.xlu0 %v1241
    %v1243 = vpop.xlane.xlu0 %1242
    %v1244 = vsel %vm80, %v1240, 0.0
    %1245 = vadd.xlane.f32.xlu0 %v1244
    %v1246 = vpop.xlane.xlu0 %1245
    %v1247 = vmul.f32 %v1243, 0.032258064
    %v1248 = vmul.f32 %v1246, 0.032258064
    %v1249 = vrsqrt.pop %v1247
    %v1250 = vmul.f32 %v1247, %v1249
    %vm1251 = vcmp.eq.f32.partialorder %v1247, inf
    %v1252 = vsel %vm1251, %v1247, %v1250
    %vm1253 = vcmp.eq.f32.partialorder %v1247, 0.0
    %v1254 = vand.u32 %v1247, 2147483648
    %v1255 = vsel %vm1253, %v1254, %v1252
    %v1256 = vrsqrt.pop %v1248
    %v1257 = vmul.f32 %v1248, %v1256
    %vm1258 = vcmp.eq.f32.partialorder %v1248, inf
    %v1259 = vsel %vm1258, %v1248, %v1257
    %vm1260 = vcmp.eq.f32.partialorder %v1248, 0.0
    %v1261 = vand.u32 %v1248, 2147483648
    %v1262 = vsel %vm1260, %v1261, %v1259
    %v1263 = vadd.f32 %v1255, 1e-06
    %v1264 = vadd.f32 %v1262, 1e-06
    %v1265 = vrcp.pop %v1263
    %v1266 = vrcp.pop %v1264
    %v1267 = vlaneseq
    %v1268 = vshrl.u32 %v1267, 7
    %v1269 = vsub.s32 3, %v1268
    %v1270 = vrot.slane %v58, %v1269
    %v1271 = vmul.f32 %v1270, %v1265
    %v1272 = vmul.f32 %v1270, %v1266
    %v1273 = vmul.f32 %v1237, %v1271
    %v1274 = vmul.f32 %v1238, %v1272
    %v1275 = vlaneseq
    %v1276 = vshrl.u32 %v1275, 7
    %v1277 = vsub.s32 4, %v1276
    %v1278 = vrot.slane %v58, %v1277
    %v1279 = vadd.f32 %v1273, %v1278
    %v1280 = vadd.f32 %v1274, %v1278
    %v1281 = vpack.c.bf16 %v1280, %v1279
    %v1282 = vld [vmem:[#allocation5] sm:$0xf]
    %v1283 = vld [vmem:[#allocation5 + $0x4] sm:$0xf]
    %v1284 = vld [vmem:[#allocation5 + $0x8] sm:$0xf]
    %v1285 = vld [vmem:[#allocation5 + $0xc] sm:$0xf]
    %v1286 = vlaneseq
    %v1287 = vshrl.u32 %v1286, 7
    %v1288 = vsub.s32 1, %v1287
    %v1289 = vrot.slane %v58, %v1288
    %v1294 = vunpack.c.l.b16 %v1282
    %v1295 = vunpack.c.l.b16 %v1283
    %v1296 = vunpack.c.l.b16 %v1284
    %v1297 = vunpack.c.l.b16 %v1285
    %v1298 = vpack.c.b16 %v1295, %v1294
    %v1299 = vpack.c.b16 %v1297, %v1296
    %v1303 = vsel %vm80, %v1281, 0
    %1305 = vmatprep.subr.bf16.mxu0 0
    %1306 = vmatpush1.bf16.msra.mxu0 0
    %1307 = vmatprep.subr.bf16.mxu0 0
    %1308 = vmatpush1.bf16.msra.mxu0 0
    %1309 = vmatprep.subr.bf16.mxu0 0
    %1310 = vmatpush1.bf16.msra.mxu0 0
    %1311 = vmatprep.subr.bf16.mxu0 0
    %1312 = vmatpush1.bf16.msra.mxu0 0
    %1313 = vmatprep.subr.bf16.mxu0 0
    %1314 = vmatpush1.bf16.msra.mxu0 0
    %1315 = vmatprep.subr.bf16.mxu0 0
    %1316 = vmatpush1.bf16.msra.mxu0 0
    %1317 = vmatprep.subr.bf16.mxu0 0
    %1318 = vmatpush1.bf16.msra.mxu0 %v1299
    %1319 = vmatprep.subr.bf16.mxu0 0
    %1320 = vmatpush1.bf16.msra.mxu0 %v1298
    %1321 = vmatprep.subr.bf16.mxu0 0
    %1322 = vmatpush2.bf16.msra.mxu0 0
    %1323 = vmatprep.subr.bf16.mxu0 0
    %1324 = vmatpush2.bf16.msra.mxu0 0
    %1325 = vmatprep.subr.bf16.mxu0 0
    %1326 = vmatpush2.bf16.msra.mxu0 0
    %1327 = vmatprep.subr.bf16.mxu0 0
    %1328 = vmatpush2.bf16.msra.mxu0 0
    %1329 = vmatprep.subr.bf16.mxu0 0
    %1330 = vmatpush2.bf16.msra.mxu0 0
    %1331 = vmatprep.subr.bf16.mxu0 0
    %1332 = vmatpush2.bf16.msra.mxu0 0
    %1333 = vmatprep.subr.bf16.mxu0 0
    %1334 = vmatpush2.bf16.msra.mxu0 0
    %1335 = vmatprep.subr.bf16.mxu0 0
    %1336 = vmatpush2.bf16.msra.mxu0 0
    %1337 = vmatprep.mubr.bf16.mxu0 0
    %1338 = vmatmul.mubr.bf16.gmra.mxu0 %v1303
    %v1339 = vpop.f32.mrf.mxu0
    %v1340 = vadd.f32 %v1289, %v1339
    %v1341 = vpop.f32.mrf.mxu0
    %v1342 = vpop.f32.mrf.mxu0
    %v1343 = vadd.f32 %v1289, %v1342
    %v1344 = vpop.f32.mrf.mxu0
    %1345 = vdwg.mxu0
    %v1346 = vmax.f32 %v1340, 0.0
    %v1347 = vmax.f32 %v1343, 0.0
    %v1348 = vpack.c.bf16 %v1347, %v1346
    %v1349 = vld [vmem:[%s5] sm:$0xf]
    %v1350 = vld [vmem:[%s5 + $0x4] sm:$0xf]
    %v1351 = vld [vmem:[%s5 + $0x8] sm:$0xf]
    %v1352 = vld [vmem:[%s5 + $0xc] sm:$0xf]
    %v1353 = vld [vmem:[%s5 + $0x10] sm:$0xf]
    %v1354 = vld [vmem:[%s5 + $0x14] sm:$0xf]
    %v1355 = vld [vmem:[%s5 + $0x18] sm:$0xf]
    %v1356 = vld [vmem:[%s5 + $0x1c] sm:$0xf]
    %v1357 = vlaneseq
    %v1358 = vshrl.u32 %v1357, 7
    %v1359 = vsub.s32 5, %v1358
    %v1360 = vrot.slane %v58, %v1359
    %v1369 = vunpack.c.l.b16 %v1349
    %v1370 = vunpack.c.l.b16 %v1350
    %v1371 = vunpack.c.l.b16 %v1351
    %v1372 = vunpack.c.l.b16 %v1352
    %v1373 = vunpack.c.l.b16 %v1353
    %v1374 = vunpack.c.l.b16 %v1354
    %v1375 = vunpack.c.l.b16 %v1355
    %v1376 = vunpack.c.l.b16 %v1356
    %v1377 = vpack.c.b16 %v1370, %v1369
    %v1378 = vpack.c.b16 %v1372, %v1371
    %v1379 = vpack.c.b16 %v1374, %v1373
    %v1380 = vpack.c.b16 %v1376, %v1375
    %vm1385 = vcmask 523264
    %v1387 = vsel %vm1385, %v1348, 0
    %1389 = vmatprep.subr.bf16.mxu0 0
    %1390 = vmatpush1.bf16.msra.mxu0 0
    %1391 = vmatprep.subr.bf16.mxu0 0
    %1392 = vmatpush1.bf16.msra.mxu0 0
    %1393 = vmatprep.subr.bf16.mxu0 0
    %1394 = vmatpush1.bf16.msra.mxu0 0
    %1395 = vmatprep.subr.bf16.mxu0 0
    %1396 = vmatpush1.bf16.msra.mxu0 0
    %1397 = vmatprep.subr.bf16.mxu0 0
    %1398 = vmatpush1.bf16.msra.mxu0 %v1380
    %1399 = vmatprep.subr.bf16.mxu0 0
    %1400 = vmatpush1.bf16.msra.mxu0 %v1379
    %1401 = vmatprep.subr.bf16.mxu0 0
    %1402 = vmatpush1.bf16.msra.mxu0 %v1378
    %1403 = vmatprep.subr.bf16.mxu0 0
    %1404 = vmatpush1.bf16.msra.mxu0 %v1377
    %1405 = vmatprep.subr.bf16.mxu0 0
    %1406 = vmatpush2.bf16.msra.mxu0 0
    %1407 = vmatprep.subr.bf16.mxu0 0
    %1408 = vmatpush2.bf16.msra.mxu0 0
    %1409 = vmatprep.subr.bf16.mxu0 0
    %1410 = vmatpush2.bf16.msra.mxu0 0
    %1411 = vmatprep.subr.bf16.mxu0 0
    %1412 = vmatpush2.bf16.msra.mxu0 0
    %1413 = vmatprep.subr.bf16.mxu0 0
    %1414 = vmatpush2.bf16.msra.mxu0 0
    %1415 = vmatprep.subr.bf16.mxu0 0
    %1416 = vmatpush2.bf16.msra.mxu0 0
    %1417 = vmatprep.subr.bf16.mxu0 0
    %1418 = vmatpush2.bf16.msra.mxu0 0
    %1419 = vmatprep.subr.bf16.mxu0 0
    %1420 = vmatpush2.bf16.msra.mxu0 0
    %1421 = vmatprep.mubr.bf16.mxu0 0
    %1422 = vmatmul.mubr.bf16.gmra.mxu0 %v1387
    %v1423 = vpop.f32.mrf.mxu0
    %v1424 = vadd.f32 %v1360, %v1423
    %v1425 = vpop.f32.mrf.mxu0
    %v1426 = vpop.f32.mrf.mxu0
    %v1427 = vadd.f32 %v1360, %v1426
    %v1428 = vpop.f32.mrf.mxu0
    %1429 = vdwg.mxu0
    %v1430 = vadd.f32 %v1279, %v1424
    %v1431 = vadd.f32 %v1280, %v1427
    %v1432 = vsel %vm80, %v1430, 0.0
    %1433 = vadd.xlane.f32.xlu0 %v1432
    %v1434 = vpop.xlane.xlu0 %1433
    %v1435 = vsel %vm80, %v1431, 0.0
    %1436 = vadd.xlane.f32.xlu0 %v1435
    %v1437 = vpop.xlane.xlu0 %1436
    %v1438 = vmul.f32 %v1434, %v1234
    %v1439 = vmul.f32 %v1437, %v1234
    %v1440 = vsub.f32 %v1430, %v1438
    %v1441 = vsub.f32 %v1431, %v1439
    %v1442 = vmul.f32 %v1440, %v1440
    %v1443 = vmul.f32 %v1441, %v1441
    %v1444 = vsel %vm80, %v1442, 0.0
    %1445 = vadd.xlane.f32.xlu0 %v1444
    %v1446 = vpop.xlane.xlu0 %1445
    %v1447 = vsel %vm80, %v1443, 0.0
    %1448 = vadd.xlane.f32.xlu0 %v1447
    %v1449 = vpop.xlane.xlu0 %1448
    %v1450 = vmul.f32 %v1446, 0.032258064
    %v1451 = vmul.f32 %v1449, 0.032258064
    %v1452 = vrsqrt.pop %v1450
    %v1453 = vmul.f32 %v1450, %v1452
    %vm1454 = vcmp.eq.f32.partialorder %v1450, inf
    %v1455 = vsel %vm1454, %v1450, %v1453
    %vm1456 = vcmp.eq.f32.partialorder %v1450, 0.0
    %v1457 = vand.u32 %v1450, 2147483648
    %v1458 = vsel %vm1456, %v1457, %v1455
    %v1459 = vrsqrt.pop %v1451
    %v1460 = vmul.f32 %v1451, %v1459
    %vm1461 = vcmp.eq.f32.partialorder %v1451, inf
    %v1462 = vsel %vm1461, %v1451, %v1460
    %vm1463 = vcmp.eq.f32.partialorder %v1451, 0.0
    %v1464 = vand.u32 %v1451, 2147483648
    %v1465 = vsel %vm1463, %v1464, %v1462
    %v1466 = vadd.f32 %v1458, 1e-06
    %v1467 = vadd.f32 %v1465, 1e-06
    %v1468 = vrcp.pop %v1466
    %v1469 = vrcp.pop %v1467
    %v1470 = vlaneseq
    %v1471 = vshrl.u32 %v1470, 7
    %v1472 = vsub.s32 6, %v1471
    %v1473 = vrot.slane %v58, %v1472
    %v1474 = vmul.f32 %v1473, %v1468
    %v1475 = vmul.f32 %v1473, %v1469
    %v1476 = vmul.f32 %v1440, %v1474
    %v1477 = vmul.f32 %v1441, %v1475
    %v1478 = vlaneseq
    %v1479 = vshrl.u32 %v1478, 7
    %v1480 = vsub.s32 7, %v1479
    %v1481 = vrot.slane %v58, %v1480
    %v1482 = vadd.f32 %v1476, %v1481
    %v1483 = vadd.f32 %v1477, %v1481
    %1484 = vst.msk [vmem:[#allocation7] sm:$0xff] %vm80, %v1482
    %1485 = vst.msk [vmem:[#allocation7 + $0x8] sm:$0xff] %vm80, %v1483
    // Predicated region
    $region38: #{tpu_custom_call.1} parent=1 // pred_check
      _
    $region39: #{tpu_custom_call.1} parent=1 // pred_check_branch
      %1487 = sbr.rel (0) target = $region41
    $region40: #{tpu_custom_call.1} parent=1 // pred_region
      %s1489 = ssub.s32 256, 256
      %1490 = vsyncadd [#allocation4], %s1489
      %s1491 = sshll.u32 [#allocation7], 4
      %s1492 = int_to_ptr.vmem [resolvable:$true] %s1491
      %1497 = dma.vmem_to_hbm [thread:$0]  %s1492, 256, %s7, [#allocation4], 128, 128, 8
    $region41: #{tpu_custom_call.1} parent=1 // pred_fallthru
      _
    // Predicated region
    $region42: #{tpu_custom_call.1} parent=1 // pred_check
      _
    $region43: #{tpu_custom_call.1} parent=1 // pred_check_branch
      %1499 = sbr.rel (0) target = $region45
    $region44: #{tpu_custom_call.1} parent=1 // pred_region
      %1500 = dma.done [#allocation4], 256
    $region45: #{tpu_custom_call.1} parent=1 // pred_fallthru
      _
    %1501 = vsyncpa [#allocation3], 1
    %1502 = vsyncpa [#allocation6], 1
    %1503 = vsyncpa [#allocation4], 1

</llo_original>
